<compile_context>
chip_gen: v7x
topology: tpu7x:2x2x1
jax: 0.10.0
libtpu: 0.0.40
codegen_flags: <defaults>
</compile_context>

<pallas_src>
import jax
import jax.numpy as jnp
from jax.experimental import pallas as pl
from jax.experimental.pallas import tpu as pltpu


def _attn_net_kernel(x_ref, w1_ref, b1_ref, w2_ref, b2_ref, a_ref):
    # x_ref:  (tile_n, L)   w1_ref: (L, D)       b1_ref: (1, D)
    # w2_ref: (D, C_pad)    b2_ref: (1, C_pad)   a_ref:  (tile_n, C_pad)
    h = jnp.dot(x_ref[...], w1_ref[...], preferred_element_type=jnp.float32)
    h = jnp.tanh(h + b1_ref[...])                              # (tile_n, D) f32
    a = jnp.dot(h.astype(w2_ref.dtype), w2_ref[...],
                preferred_element_type=jnp.float32)            # (tile_n, C_pad)
    a_ref[...] = (a + b2_ref[...]).astype(a_ref.dtype)


def attn_net_forward(x, w1, b1, w2, b2, *, tile_n=256):
    """Pallas implementation of Attn_Net.forward. Returns (A, x)."""
    N, L = x.shape
    D = w1.shape[1]
    C = w2.shape[1]
    itemsize = jnp.dtype(x.dtype).itemsize

    # tile_n must respect f32 (8) / bf16 (16) sublane packing.
    assert tile_n % (16 if itemsize == 2 else 8) == 0

    # Pad N to a multiple of tile_n (padded rows produce garbage A, sliced off below).
    n_pad = (-N) % tile_n
    x_p = jnp.pad(x, ((0, n_pad), (0, 0))) if n_pad else x
    Np = N + n_pad

    # Lane-dense output: pad the n_classes axis to 128 lanes with zero columns.
    C_pad = ((C + 127) // 128) * 128
    w2_p = jnp.pad(w2, ((0, 0), (0, C_pad - C)))
    b2_p = jnp.pad(b2.reshape(1, C), ((0, 0), (0, C_pad - C)))
    b1_2d = b1.reshape(1, D)

    grid = (Np // tile_n,)

    # VMEM budget: x double-buffer + output double-buffer + (double-buffered) weights.
    vmem_bytes = (2 * tile_n * L * itemsize
                  + 2 * tile_n * C_pad * itemsize
                  + 2 * (L * D + D * C_pad + D + C_pad) * itemsize)
    vmem_limit = int(min(64 * 1024 * 1024,
                         max(16 * 1024 * 1024, int(vmem_bytes * 1.5))))

    cost = pl.CostEstimate(
        flops=2 * Np * L * D + 2 * Np * D * C_pad,
        transcendentals=Np * D,
        bytes_accessed=(Np * L * itemsize + L * D * itemsize
                        + D * C_pad * itemsize + (D + C_pad) * itemsize
                        + Np * C_pad * itemsize),
    )

    a_pad = pl.pallas_call(
        _attn_net_kernel,
        out_shape=jax.ShapeDtypeStruct((Np, C_pad), x.dtype),
        grid=grid,
        in_specs=[
            pl.BlockSpec((tile_n, L), lambda i: (i, 0)),   # x tile (pipelined)
            pl.BlockSpec((L, D), lambda i: (0, 0)),        # W1 (resident)
            pl.BlockSpec((1, D), lambda i: (0, 0)),        # b1
            pl.BlockSpec((D, C_pad), lambda i: (0, 0)),    # W2 (zero-padded cols)
            pl.BlockSpec((1, C_pad), lambda i: (0, 0)),    # b2
        ],
        out_specs=pl.BlockSpec((tile_n, C_pad), lambda i: (i, 0)),
        compiler_params=pltpu.CompilerParams(
            dimension_semantics=("parallel",),
            vmem_limit_bytes=vmem_limit),
        cost_estimate=cost,
    )(x_p, w1, b1_2d, w2_p, b2_p)

    return a_pad[:N, :C], x


def init_attn_net_params(key, L, D, n_classes, dtype=jnp.float32):
    """Deterministic init mirroring nn.Linear's uniform(-1/sqrt(fan_in), 1/sqrt(fan_in))."""
    k1, k2, k3, k4 = jax.random.split(key, 4)
    lim1 = 1.0 / jnp.sqrt(jnp.float32(L))
    lim2 = 1.0 / jnp.sqrt(jnp.float32(D))
    w1 = jax.random.uniform(k1, (L, D), dtype, -lim1, lim1)
    b1 = jax.random.uniform(k2, (D,), dtype, -lim1, lim1)
    w2 = jax.random.uniform(k3, (D, n_classes), dtype, -lim2, lim2)
    b2 = jax.random.uniform(k4, (n_classes,), dtype, -lim2, lim2)
    return w1, b1, w2, b2


if __name__ == "__main__":
    # Module-default feature sizes (L=1024, D=256, n_classes=1); N = number of
    # MIL instances, deliberately not a multiple of tile_n to exercise padding.
    N, L, D, n_classes = 300, 1024, 256, 1

    key = jax.random.PRNGKey(0)
    kx, kp = jax.random.split(key)
    x = jax.random.normal(kx, (N, L), dtype=jnp.float32)
    w1, b1, w2, b2 = init_attn_net_params(kp, L, D, n_classes)

    a, x_out = attn_net_forward(x, w1, b1, w2, b2, tile_n=256)
    jax.block_until_ready((a, x_out))

    # Pure-JAX reference check of the hot path.
    a_ref = jnp.tanh(x @ w1 + b1) @ w2 + b2
    assert a.shape == (N, n_classes)
    assert x_out.shape == (N, L)
    assert jnp.allclose(a, a_ref, atol=1e-4, rtol=1e-5)
    assert jnp.array_equal(x_out, x)

    print("KERNEL_OK")
</pallas_src>

<mosaic_0001>
module attributes {stable_mosaic.version = 11 : i64} {
  func.func @_attn_net_kernel(%arg0: i32, %arg1: memref<256x1024xf32, #tpu.memory_space<vmem>>, %arg2: memref<1024x256xf32, #tpu.memory_space<vmem>>, %arg3: memref<1x256xf32, #tpu.memory_space<vmem>>, %arg4: memref<256x128xf32, #tpu.memory_space<vmem>>, %arg5: memref<1x128xf32, #tpu.memory_space<vmem>>, %arg6: memref<256x128xf32, #tpu.memory_space<vmem>>) attributes {dimension_semantics = [#tpu.dimension_semantics<parallel>], iteration_bounds = array<i64: 2>, scalar_prefetch = 0 : i64, scratch_operands = 0 : i64, tpu.core_type = #tpu.core_type<tc>, window_params = [{transform_indices = @transform_0, window_bounds = array<i64: 256, 1024>}, {pipeline_mode = #tpu.pipeline_mode<synchronous>, transform_indices = @transform_1, window_bounds = array<i64: 1024, 256>}, {pipeline_mode = #tpu.pipeline_mode<synchronous>, transform_indices = @transform_2, window_bounds = array<i64: 1, 256>}, {pipeline_mode = #tpu.pipeline_mode<synchronous>, transform_indices = @transform_3, window_bounds = array<i64: 256, 128>}, {pipeline_mode = #tpu.pipeline_mode<synchronous>, transform_indices = @transform_4, window_bounds = array<i64: 1, 128>}, {transform_indices = @transform_5, window_bounds = array<i64: 256, 128>}]} {
    %c0 = arith.constant 0 : index
    %c0_0 = arith.constant 0 : index
    %0 = vector.load %arg1[%c0, %c0_0] : memref<256x1024xf32, #tpu.memory_space<vmem>>, vector<256x1024xf32>
    %c0_1 = arith.constant 0 : index
    %c0_2 = arith.constant 0 : index
    %1 = vector.load %arg2[%c0_1, %c0_2] : memref<1024x256xf32, #tpu.memory_space<vmem>>, vector<1024x256xf32>
    %cst = arith.constant dense<0.000000e+00> : vector<256x256xf32>
    %2 = tpu.matmul %0, %1, %cst {dimension_numbers = #tpu.dot_dimension_numbers<[1], [0], [0], [1], [0, 0, 1, 1], [], []>} : vector<256x1024xf32>, vector<1024x256xf32>, vector<256x256xf32> -> vector<256x256xf32>
    %c0_3 = arith.constant 0 : index
    %c0_4 = arith.constant 0 : index
    %3 = vector.load %arg3[%c0_3, %c0_4] : memref<1x256xf32, #tpu.memory_space<vmem>>, vector<1x256xf32>
    %4 = vector.broadcast %3 : vector<1x256xf32> to vector<256x256xf32>
    %5 = arith.addf %2, %4 : vector<256x256xf32>
    %6 = math.tanh %5 : vector<256x256xf32>
    %c0_5 = arith.constant 0 : index
    %c0_6 = arith.constant 0 : index
    %7 = vector.load %arg4[%c0_5, %c0_6] : memref<256x128xf32, #tpu.memory_space<vmem>>, vector<256x128xf32>
    %cst_7 = arith.constant dense<0.000000e+00> : vector<256x128xf32>
    %8 = tpu.matmul %6, %7, %cst_7 {dimension_numbers = #tpu.dot_dimension_numbers<[1], [0], [0], [1], [0, 0, 1, 1], [], []>} : vector<256x256xf32>, vector<256x128xf32>, vector<256x128xf32> -> vector<256x128xf32>
    %c0_8 = arith.constant 0 : index
    %c0_9 = arith.constant 0 : index
    %9 = vector.load %arg5[%c0_8, %c0_9] : memref<1x128xf32, #tpu.memory_space<vmem>>, vector<1x128xf32>
    %10 = vector.broadcast %9 : vector<1x128xf32> to vector<256x128xf32>
    %11 = arith.addf %8, %10 : vector<256x128xf32>
    %c0_10 = arith.constant 0 : index
    %c0_11 = arith.constant 0 : index
    %12 = vector.load %arg6[%c0_10, %c0_11] : memref<256x128xf32, #tpu.memory_space<vmem>>, vector<256x128xf32>
    tpu.vector_store %arg6[%c0_10, %c0_11], %11 {strides = array<i32>} : memref<256x128xf32, #tpu.memory_space<vmem>>, vector<256x128xf32>,
    return
  }
  func.func @transform_0(%arg0: i32) -> (i32, i32) {
    %c0_i32 = arith.constant 0 : i32
    %c0_i32_0 = arith.constant 0 : i32
    return %arg0, %c0_i32 : i32, i32
  }
  func.func @transform_1(%arg0: i32) -> (i32, i32) {
    %c0_i32 = arith.constant 0 : i32
    %c0_i32_0 = arith.constant 0 : i32
    %c0_i32_1 = arith.constant 0 : i32
    return %c0_i32, %c0_i32_0 : i32, i32
  }
  func.func @transform_2(%arg0: i32) -> (i32, i32) {
    %c0_i32 = arith.constant 0 : i32
    %c0_i32_0 = arith.constant 0 : i32
    %c0_i32_1 = arith.constant 0 : i32
    return %c0_i32, %c0_i32_0 : i32, i32
  }
  func.func @transform_3(%arg0: i32) -> (i32, i32) {
    %c0_i32 = arith.constant 0 : i32
    %c0_i32_0 = arith.constant 0 : i32
    %c0_i32_1 = arith.constant 0 : i32
    return %c0_i32, %c0_i32_0 : i32, i32
  }
  func.func @transform_4(%arg0: i32) -> (i32, i32) {
    %c0_i32 = arith.constant 0 : i32
    %c0_i32_0 = arith.constant 0 : i32
    %c0_i32_1 = arith.constant 0 : i32
    return %c0_i32, %c0_i32_0 : i32, i32
  }
  func.func @transform_5(%arg0: i32) -> (i32, i32) {
    %c0_i32 = arith.constant 0 : i32
    %c0_i32_0 = arith.constant 0 : i32
    return %arg0, %c0_i32 : i32, i32
  }
}

</mosaic_0001>

<llo_original>
// kernel: tpu_custom_call.1
$region0: #{tpu_custom_call.1}
  #allocation0 [shape = 'u32[]', space=smem, size = 0x4, offset = 0x4, fixed_abs, tag = 'smem constant byte address 0x4 - core index']
  #allocation1 [shape = 'u32[144,128]{1,0:T(1,128)}', space=vmem, size = 0x12000, scoped, tag = 'internal scratch']
  %s0 = inlined_call_operand.hbm [shape: f32[512,1024], index: 0, kind: input, shape index: {}]
  %s1 = inlined_call_operand.hbm [shape: f32[1024,256], index: 1, kind: input, shape index: {}]
  %s2 = inlined_call_operand.hbm [shape: f32[1,256], index: 2, kind: input, shape index: {}]
  %s3 = inlined_call_operand.hbm [shape: f32[256,128], index: 3, kind: input, shape index: {}]
  %s4 = inlined_call_operand.hbm [shape: f32[1,128], index: 4, kind: input, shape index: {}]
  %s5 = inlined_call_operand.hbm [shape: f32[512,128], index: 5, kind: output, shape index: {}]
  %s6 = sld [smem:[#allocation0]]
  $region73: #{tpu_custom_call.1} parent=0
    _
  %s8 = ssub.s32 1, %s6
  %s9 = scalar_select 0, %s8, %s6
  $region1: #{tpu_custom_call.1} parent=0
    #allocation2 [shape = 'u8[2097152]{0}', space=vmem, size = 0x200000, scoped, tag = 'input window, operand 0']
    #allocation3 [shape = 's32[2]{0}', space=sflag, size = 0x8, scoped, tag = 'scoped memory for tpu_custom_call.1']
    #allocation4 [shape = 's32[2]{0}', space=sflag, size = 0x8, scoped, tag = 'scoped memory for tpu_custom_call.1']
    #allocation5 [shape = 'u8[1048576]{0}', space=vmem, size = 0x100000, scoped, tag = 'input window, operand 1, single buffered']
    #allocation6 [shape = 's32[1]{0}', space=sflag, size = 0x4, scoped, tag = 'scoped memory for tpu_custom_call.1']
    #allocation7 [shape = 'u8[1024]{0}', space=vmem, size = 0x400, scoped, tag = 'input window, operand 2, single buffered']
    #allocation8 [shape = 'u8[131072]{0}', space=vmem, size = 0x20000, scoped, tag = 'input window, operand 3, single buffered']
    #allocation9 [shape = 's32[1]{0}', space=sflag, size = 0x4, scoped, tag = 'scoped memory for tpu_custom_call.1']
    #allocation10 [shape = 'u8[512]{0}', space=vmem, size = 0x400, scoped, tag = 'input window, operand 4, single buffered']
    #allocation11 [shape = 'u8[262144]{0}', space=vmem, size = 0x40000, scoped, tag = 'output window, operand 0']
    %10 = vsyncpa [#allocation3], 0
    %s11 = scalar_lea.sflag [#allocation3], 1
    %12 = vsyncpa %s11, 0
    %13 = vsyncpa [#allocation6], 0
    %14 = vsyncpa [#allocation9], 0
    %15 = vsyncpa [#allocation4], 0
    %s16 = scalar_lea.sflag [#allocation4], 1
    %17 = vsyncpa %s16, 0
    loop: start=0, step=1, limit=4
    $region2: #{tpu_custom_call.1} parent=1 // loop_pre_header
      _
    $region3: #{tpu_custom_call.1} parent=1 // loop_header
      %s19 = sphi 0, %s23
      %p20 = scmp.ge.s32.totalorder %s19, 4
      %s29 = sphi 0, %s31
      %s32 = sphi 0, %s29
      %s33 = sphi 0, %s32
      %s49 = sphi 0, %s33
      %s53 = sphi 0, %s53
      %s55 = sphi 0, %s53
      %s56 = sphi 0, %s55
      %s70 = sphi 0, %s56
      %s74 = sphi 0, %s74
      %s76 = sphi 0, %s74
      %s77 = sphi 0, %s76
      %s91 = sphi 0, %s77
      %s95 = sphi 0, %s95
      %s97 = sphi 0, %s95
      %s98 = sphi 0, %s97
      %s112 = sphi 0, %s98
      %s116 = sphi 0, %s116
      %s118 = sphi 0, %s116
      %s119 = sphi 0, %s118
      %s133 = sphi 0, %s119
      %s139 = sphi 0, %s141
      %s142 = sphi 0, %s139
      %s143 = sphi 0, %s142
      %s159 = sphi 0, %s143
    $region4: #{tpu_custom_call.1} parent=1 // loop_header_branch
      %22 = sbr.rel (%p20) target = $region8
    $region5: #{tpu_custom_call.1} parent=1 // loop_body
      %s24 = ssub.s32 %s19, 1
      %s25 = ssub.s32 %s19, 2
      %s26 = sadd.s32 %s19, 1
      %s27 = ssub.s32 %s19, %s26
      %p28 = scmp.eq.s32.totalorder %s27, 0
      %s30 = sadd.s32 %s29, 1
      %s31 = scalar_select %p28, %s29, %s30
      %p34 = pneg %p28
      %p35 = scmp.eq.s32.totalorder %s19, 1
      %p36 = por %p34, %p35
      %p37 = scmp.ne.s32.totalorder %s29, %s32
      %p38 = scmp.eq.s32.totalorder %s19, 0
      %p39 = por %p37, %p38
      %p40 = scmp.ne.s32.totalorder %s29, %s32
      %p41 = scmp.eq.s32.totalorder %s24, 1
      %p42 = por %p40, %p41
      %p43 = scmp.ne.s32.totalorder %s32, %s33
      %p44 = scmp.eq.s32.totalorder %s24, 0
      %p45 = por %p43, %p44
      %p46 = scmp.ne.s32.totalorder %s32, %s33
      %p47 = scmp.eq.s32.totalorder %s25, 1
      %p48 = por %p46, %p47
      %p50 = scmp.ne.s32.totalorder %s33, %s49
      %p51 = scmp.eq.s32.totalorder %s25, 0
      %p52 = por %p50, %p51
      %s54 = sadd.s32 %s53, 1
      %p57 = scmp.eq.s32.totalorder %s19, 1
      %p58 = scmp.ne.s32.totalorder %s53, %s55
      %p59 = scmp.eq.s32.totalorder %s19, 0
      %p60 = por %p58, %p59
      %p61 = scmp.ne.s32.totalorder %s53, %s55
      %p62 = scmp.eq.s32.totalorder %s24, 1
      %p63 = por %p61, %p62
      %p64 = scmp.ne.s32.totalorder %s55, %s56
      %p65 = scmp.eq.s32.totalorder %s24, 0
      %p66 = por %p64, %p65
      %p67 = scmp.ne.s32.totalorder %s55, %s56
      %p68 = scmp.eq.s32.totalorder %s25, 1
      %p69 = por %p67, %p68
      %p71 = scmp.ne.s32.totalorder %s56, %s70
      %p72 = scmp.eq.s32.totalorder %s25, 0
      %p73 = por %p71, %p72
      %s75 = sadd.s32 %s74, 1
      %p78 = scmp.eq.s32.totalorder %s19, 1
      %p79 = scmp.ne.s32.totalorder %s74, %s76
      %p80 = scmp.eq.s32.totalorder %s19, 0
      %p81 = por %p79, %p80
      %p82 = scmp.ne.s32.totalorder %s74, %s76
      %p83 = scmp.eq.s32.totalorder %s24, 1
      %p84 = por %p82, %p83
      %p85 = scmp.ne.s32.totalorder %s76, %s77
      %p86 = scmp.eq.s32.totalorder %s24, 0
      %p87 = por %p85, %p86
      %p88 = scmp.ne.s32.totalorder %s76, %s77
      %p89 = scmp.eq.s32.totalorder %s25, 1
      %p90 = por %p88, %p89
      %p92 = scmp.ne.s32.totalorder %s77, %s91
      %p93 = scmp.eq.s32.totalorder %s25, 0
      %p94 = por %p92, %p93
      %s96 = sadd.s32 %s95, 1
      %p99 = scmp.eq.s32.totalorder %s19, 1
      %p100 = scmp.ne.s32.totalorder %s95, %s97
      %p101 = scmp.eq.s32.totalorder %s19, 0
      %p102 = por %p100, %p101
      %p103 = scmp.ne.s32.totalorder %s95, %s97
      %p104 = scmp.eq.s32.totalorder %s24, 1
      %p105 = por %p103, %p104
      %p106 = scmp.ne.s32.totalorder %s97, %s98
      %p107 = scmp.eq.s32.totalorder %s24, 0
      %p108 = por %p106, %p107
      %p109 = scmp.ne.s32.totalorder %s97, %s98
      %p110 = scmp.eq.s32.totalorder %s25, 1
      %p111 = por %p109, %p110
      %p113 = scmp.ne.s32.totalorder %s98, %s112
      %p114 = scmp.eq.s32.totalorder %s25, 0
      %p115 = por %p113, %p114
      %s117 = sadd.s32 %s116, 1
      %p120 = scmp.eq.s32.totalorder %s19, 1
      %p121 = scmp.ne.s32.totalorder %s116, %s118
      %p122 = scmp.eq.s32.totalorder %s19, 0
      %p123 = por %p121, %p122
      %p124 = scmp.ne.s32.totalorder %s116, %s118
      %p125 = scmp.eq.s32.totalorder %s24, 1
      %p126 = por %p124, %p125
      %p127 = scmp.ne.s32.totalorder %s118, %s119
      %p128 = scmp.eq.s32.totalorder %s24, 0
      %p129 = por %p127, %p128
      %p130 = scmp.ne.s32.totalorder %s118, %s119
      %p131 = scmp.eq.s32.totalorder %s25, 1
      %p132 = por %p130, %p131
      %p134 = scmp.ne.s32.totalorder %s119, %s133
      %p135 = scmp.eq.s32.totalorder %s25, 0
      %p136 = por %p134, %p135
      %s137 = ssub.s32 %s19, %s26
      %p138 = scmp.eq.s32.totalorder %s137, 0
      %s140 = sadd.s32 %s139, 1
      %s141 = scalar_select %p138, %s139, %s140
      %p144 = pneg %p138
      %p145 = scmp.eq.s32.totalorder %s19, 1
      %p146 = por %p144, %p145
      %p147 = scmp.ne.s32.totalorder %s139, %s142
      %p148 = scmp.eq.s32.totalorder %s19, 0
      %p149 = por %p147, %p148
      %p150 = scmp.ne.s32.totalorder %s139, %s142
      %p151 = scmp.eq.s32.totalorder %s24, 1
      %p152 = por %p150, %p151
      %p153 = scmp.ne.s32.totalorder %s142, %s143
      %p154 = scmp.eq.s32.totalorder %s24, 0
      %p155 = por %p153, %p154
      %p156 = scmp.ne.s32.totalorder %s142, %s143
      %p157 = scmp.eq.s32.totalorder %s25, 1
      %p158 = por %p156, %p157
      %p160 = scmp.ne.s32.totalorder %s143, %s159
      %p161 = scmp.eq.s32.totalorder %s25, 0
      %p162 = por %p160, %p161
      %p163 = scmp.le.s32.totalorder 1, %s19
      %p164 = scmp.lt.s32.totalorder %s19, 3
      %p165 = pnand %p163, %p164
      %p166 = pneg %p165
      // Predicated region
      $region9: #{tpu_custom_call.1} parent=5 // pred_check
        _
      $region10: #{tpu_custom_call.1} parent=5 // pred_check_branch
        %168 = sbr.rel (%p165) target = $region12
      $region11: #{tpu_custom_call.1} parent=5 // pred_region
        %s169 = ssub.s32 %s19, 1
        // Predicated region
        $region13: #{tpu_custom_call.1} parent=11 // pred_check
          %p170 = pneg %p66
        $region14: #{tpu_custom_call.1} parent=11 // pred_check_branch
          %172 = sbr.rel (%p170) target = $region16
        $region15: #{tpu_custom_call.1} parent=11 // pred_region
          %s174 = ssub.s32 32768, 32768
          %175 = vsyncadd [#allocation6], %s174
          %s176 = sshll.u32 [#allocation5], 4
          %s177 = int_to_ptr.vmem [resolvable:$true] %s176
          %182 = dma.hbm_to_vmem [thread:$0]  %s1, 32768, %s177, [#allocation6], 256, 256, 16
        $region16: #{tpu_custom_call.1} parent=11 // pred_fallthru
          _
        // Predicated region
        $region17: #{tpu_custom_call.1} parent=11 // pred_check
          %p183 = pneg %p87
        $region18: #{tpu_custom_call.1} parent=11 // pred_check_branch
          %185 = sbr.rel (%p183) target = $region20
        $region19: #{tpu_custom_call.1} parent=11 // pred_region
          %s187 = ssub.s32 32, 32
          %188 = vsyncadd [#allocation6], %s187
          %s190 = sshll.u32 [#allocation7], 4
          %s191 = int_to_ptr.vmem [resolvable:$true] %s190
          %193 = dma.hbm_to_vmem [thread:$0]  %s2, 32, %s191, [#allocation6]
        $region20: #{tpu_custom_call.1} parent=11 // pred_fallthru
          _
        // Predicated region
        $region21: #{tpu_custom_call.1} parent=11 // pred_check
          %p194 = pneg %p108
        $region22: #{tpu_custom_call.1} parent=11 // pred_check_branch
          %196 = sbr.rel (%p194) target = $region24
        $region23: #{tpu_custom_call.1} parent=11 // pred_region
          %s198 = ssub.s32 4096, 4096
          %199 = vsyncadd [#allocation9], %s198
          %s200 = sshll.u32 [#allocation8], 4
          %s201 = int_to_ptr.vmem [resolvable:$true] %s200
          %206 = dma.hbm_to_vmem [thread:$0]  %s3, 4096, %s201, [#allocation9], 128, 128, 8
        $region24: #{tpu_custom_call.1} parent=11 // pred_fallthru
          _
        // Predicated region
        $region25: #{tpu_custom_call.1} parent=11 // pred_check
          %p207 = pneg %p129
        $region26: #{tpu_custom_call.1} parent=11 // pred_check_branch
          %209 = sbr.rel (%p207) target = $region28
        $region27: #{tpu_custom_call.1} parent=11 // pred_region
          %s211 = ssub.s32 16, 16
          %212 = vsyncadd [#allocation9], %s211
          %s214 = sshll.u32 [#allocation10], 4
          %s215 = int_to_ptr.vmem [resolvable:$true] %s214
          %217 = dma.hbm_to_vmem [thread:$0]  %s4, 16, %s215, [#allocation9]
        $region28: #{tpu_custom_call.1} parent=11 // pred_fallthru
          _
      $region12: #{tpu_custom_call.1} parent=5 // pred_fallthru
        _
      %p218 = scmp.lt.s32.totalorder %s19, 2
      // Predicated region
      $region29: #{tpu_custom_call.1} parent=5 // pred_check
        %p219 = pneg %p218
      $region30: #{tpu_custom_call.1} parent=5 // pred_check_branch
        %221 = sbr.rel (%p219) target = $region32
      $region31: #{tpu_custom_call.1} parent=5 // pred_region
        // Predicated region
        $region33: #{tpu_custom_call.1} parent=31 // pred_check
          %p222 = pneg %p39
        $region34: #{tpu_custom_call.1} parent=31 // pred_check_branch
          %224 = sbr.rel (%p222) target = $region36
        $region35: #{tpu_custom_call.1} parent=31 // pred_region
          %s225 = sand.u32 %s29, 1
          %s226 = scalar_lea.sflag [#allocation3], %s225
          %s227 = sand.u32 %s29, 1
          %s228 = smul.addr %s227, 2048
          %s229 = scalar_lea.vmem [#allocation2], %s228
          %s230 = smul.u32 32, %s19
          %s232 = ssub.s32 32768, 32768
          %233 = vsyncadd %s226, %s232
          %s234 = smul.addr %s230, 8
          %s235 = smul.addr %s234, 128
          %s236 = scalar_lea.hbm %s0, %s235
          %s237 = sshll.u32 %s229, 4
          %s238 = int_to_ptr.vmem [resolvable:$true] %s237
          %243 = dma.hbm_to_vmem [thread:$0]  %s236, 32768, %s238, %s226, 1024, 1024, 64
        $region36: #{tpu_custom_call.1} parent=31 // pred_fallthru
          _
      $region32: #{tpu_custom_call.1} parent=5 // pred_fallthru
        _
      %p244 = scmp.le.s32.totalorder 1, %s19
      %p245 = scmp.lt.s32.totalorder %s19, 3
      %p246 = pnand %p244, %p245
      %p247 = pneg %p246
      // Predicated region
      $region37: #{tpu_custom_call.1} parent=5 // pred_check
        _
      $region38: #{tpu_custom_call.1} parent=5 // pred_check_branch
        %249 = sbr.rel (%p246) target = $region40
      $region39: #{tpu_custom_call.1} parent=5 // pred_region
        %s250 = ssub.s32 %s19, 1
        %s251 = sand.u32 %s32, 1
        %s252 = scalar_lea.sflag [#allocation3], %s251
        %s253 = sand.u32 %s32, 1
        %s254 = smul.addr %s253, 2048
        %s255 = scalar_lea.vmem [#allocation2], %s254
        // Predicated region
        $region41: #{tpu_custom_call.1} parent=39 // pred_check
          %p256 = pneg %p45
        $region42: #{tpu_custom_call.1} parent=39 // pred_check_branch
          %258 = sbr.rel (%p256) target = $region44
        $region43: #{tpu_custom_call.1} parent=39 // pred_region
          %259 = dma.done %s252, 32768
        $region44: #{tpu_custom_call.1} parent=39 // pred_fallthru
          _
        // Predicated region
        $region45: #{tpu_custom_call.1} parent=39 // pred_check
          %p260 = pneg %p66
        $region46: #{tpu_custom_call.1} parent=39 // pred_check_branch
          %262 = sbr.rel (%p260) target = $region48
        $region47: #{tpu_custom_call.1} parent=39 // pred_region
          %263 = dma.done [#allocation6], 32768
        $region48: #{tpu_custom_call.1} parent=39 // pred_fallthru
          _
        // Predicated region
        $region49: #{tpu_custom_call.1} parent=39 // pred_check
          %p264 = pneg %p87
        $region50: #{tpu_custom_call.1} parent=39 // pred_check_branch
          %266 = sbr.rel (%p264) target = $region52
        $region51: #{tpu_custom_call.1} parent=39 // pred_region
          %267 = dma.done [#allocation6], 32
        $region52: #{tpu_custom_call.1} parent=39 // pred_fallthru
          _
        // Predicated region
        $region53: #{tpu_custom_call.1} parent=39 // pred_check
          %p268 = pneg %p108
        $region54: #{tpu_custom_call.1} parent=39 // pred_check_branch
          %270 = sbr.rel (%p268) target = $region56
        $region55: #{tpu_custom_call.1} parent=39 // pred_region
          %271 = dma.done [#allocation9], 4096
        $region56: #{tpu_custom_call.1} parent=39 // pred_fallthru
          _
        // Predicated region
        $region57: #{tpu_custom_call.1} parent=39 // pred_check
          %p272 = pneg %p129
        $region58: #{tpu_custom_call.1} parent=39 // pred_check_branch
          %274 = sbr.rel (%p272) target = $region60
        $region59: #{tpu_custom_call.1} parent=39 // pred_region
          %275 = dma.done [#allocation9], 16
        $region60: #{tpu_custom_call.1} parent=39 // pred_fallthru
          _
        %s276 = sand.u32 %s32, 1
        %s277 = scalar_lea.sflag [#allocation3], %s276
        %s278 = sand.u32 %s32, 1
        %s279 = smul.addr %s278, 2048
        %s280 = scalar_lea.vmem [#allocation2], %s279
        %p281 = pneg %p45
        %p282 = pneg %p42
        %p283 = pneg %p66
        %p284 = pneg %p63
        %p285 = pneg %p87
        %p286 = pneg %p84
        %p287 = pneg %p108
        %p288 = pneg %p105
        %p289 = pneg %p129
        %p290 = pneg %p126
        %p291 = pneg %p155
        %p292 = pneg %p152
        %s293 = sand.u32 %s142, 1
        %s294 = scalar_lea.sflag [#allocation4], %s293
        %s295 = sand.u32 %s142, 1
        %s296 = smul.addr %s295, 256
        %s297 = scalar_lea.vmem [#allocation11], %s296
        %s298 = smul.u32 32, %s24
        %s299 = smul.u32 32, %s24
        %v300 = vld [vmem:[%s255] sm:$0xff]
        %v301 = vld [vmem:[%s255 + $0x8] sm:$0xff]
        %v302 = vld [vmem:[%s255 + $0x10] sm:$0xff]
        %v303 = vld [vmem:[%s255 + $0x18] sm:$0xff]
        %v304 = vld [vmem:[%s255 + $0x20] sm:$0xff]
        %v305 = vld [vmem:[%s255 + $0x28] sm:$0xff]
        %v306 = vld [vmem:[%s255 + $0x30] sm:$0xff]
        %v307 = vld [vmem:[%s255 + $0x38] sm:$0xff]
        %v308 = vld [vmem:[%s255 + $0x40] sm:$0xff]
        %v309 = vld [vmem:[%s255 + $0x48] sm:$0xff]
        %v310 = vld [vmem:[%s255 + $0x50] sm:$0xff]
        %v311 = vld [vmem:[%s255 + $0x58] sm:$0xff]
        %v312 = vld [vmem:[%s255 + $0x60] sm:$0xff]
        %v313 = vld [vmem:[%s255 + $0x68] sm:$0xff]
        %v314 = vld [vmem:[%s255 + $0x70] sm:$0xff]
        %v315 = vld [vmem:[%s255 + $0x78] sm:$0xff]
        %v316 = vld [vmem:[%s255 + $0x80] sm:$0xff]
        %v317 = vld [vmem:[%s255 + $0x88] sm:$0xff]
        %v318 = vld [vmem:[%s255 + $0x90] sm:$0xff]
        %v319 = vld [vmem:[%s255 + $0x98] sm:$0xff]
        %v320 = vld [vmem:[%s255 + $0xa0] sm:$0xff]
        %v321 = vld [vmem:[%s255 + $0xa8] sm:$0xff]
        %v322 = vld [vmem:[%s255 + $0xb0] sm:$0xff]
        %v323 = vld [vmem:[%s255 + $0xb8] sm:$0xff]
        %v324 = vld [vmem:[%s255 + $0xc0] sm:$0xff]
        %v325 = vld [vmem:[%s255 + $0xc8] sm:$0xff]
        %v326 = vld [vmem:[%s255 + $0xd0] sm:$0xff]
        %v327 = vld [vmem:[%s255 + $0xd8] sm:$0xff]
        %v328 = vld [vmem:[%s255 + $0xe0] sm:$0xff]
        %v329 = vld [vmem:[%s255 + $0xe8] sm:$0xff]
        %v330 = vld [vmem:[%s255 + $0xf0] sm:$0xff]
        %v331 = vld [vmem:[%s255 + $0xf8] sm:$0xff]
        %v332 = vld [vmem:[%s255 + $0x100] sm:$0xff]
        %v333 = vld [vmem:[%s255 + $0x108] sm:$0xff]
        %v334 = vld [vmem:[%s255 + $0x110] sm:$0xff]
        %v335 = vld [vmem:[%s255 + $0x118] sm:$0xff]
        %v336 = vld [vmem:[%s255 + $0x120] sm:$0xff]
        %v337 = vld [vmem:[%s255 + $0x128] sm:$0xff]
        %v338 = vld [vmem:[%s255 + $0x130] sm:$0xff]
        %v339 = vld [vmem:[%s255 + $0x138] sm:$0xff]
        %v340 = vld [vmem:[%s255 + $0x140] sm:$0xff]
        %v341 = vld [vmem:[%s255 + $0x148] sm:$0xff]
        %v342 = vld [vmem:[%s255 + $0x150] sm:$0xff]
        %v343 = vld [vmem:[%s255 + $0x158] sm:$0xff]
        %v344 = vld [vmem:[%s255 + $0x160] sm:$0xff]
        %v345 = vld [vmem:[%s255 + $0x168] sm:$0xff]
        %v346 = vld [vmem:[%s255 + $0x170] sm:$0xff]
        %v347 = vld [vmem:[%s255 + $0x178] sm:$0xff]
        %v348 = vld [vmem:[%s255 + $0x180] sm:$0xff]
        %v349 = vld [vmem:[%s255 + $0x188] sm:$0xff]
        %v350 = vld [vmem:[%s255 + $0x190] sm:$0xff]
        %v351 = vld [vmem:[%s255 + $0x198] sm:$0xff]
        %v352 = vld [vmem:[%s255 + $0x1a0] sm:$0xff]
        %v353 = vld [vmem:[%s255 + $0x1a8] sm:$0xff]
        %v354 = vld [vmem:[%s255 + $0x1b0] sm:$0xff]
        %v355 = vld [vmem:[%s255 + $0x1b8] sm:$0xff]
        %v356 = vld [vmem:[%s255 + $0x1c0] sm:$0xff]
        %v357 = vld [vmem:[%s255 + $0x1c8] sm:$0xff]
        %v358 = vld [vmem:[%s255 + $0x1d0] sm:$0xff]
        %v359 = vld [vmem:[%s255 + $0x1d8] sm:$0xff]
        %v360 = vld [vmem:[%s255 + $0x1e0] sm:$0xff]
        %v361 = vld [vmem:[%s255 + $0x1e8] sm:$0xff]
        %v362 = vld [vmem:[%s255 + $0x1f0] sm:$0xff]
        %v363 = vld [vmem:[%s255 + $0x1f8] sm:$0xff]
        %v364 = vld [vmem:[%s255 + $0x200] sm:$0xff]
        %v365 = vld [vmem:[%s255 + $0x208] sm:$0xff]
        %v366 = vld [vmem:[%s255 + $0x210] sm:$0xff]
        %v367 = vld [vmem:[%s255 + $0x218] sm:$0xff]
        %v368 = vld [vmem:[%s255 + $0x220] sm:$0xff]
        %v369 = vld [vmem:[%s255 + $0x228] sm:$0xff]
        %v370 = vld [vmem:[%s255 + $0x230] sm:$0xff]
        %v371 = vld [vmem:[%s255 + $0x238] sm:$0xff]
        %v372 = vld [vmem:[%s255 + $0x240] sm:$0xff]
        %v373 = vld [vmem:[%s255 + $0x248] sm:$0xff]
        %v374 = vld [vmem:[%s255 + $0x250] sm:$0xff]
        %v375 = vld [vmem:[%s255 + $0x258] sm:$0xff]
        %v376 = vld [vmem:[%s255 + $0x260] sm:$0xff]
        %v377 = vld [vmem:[%s255 + $0x268] sm:$0xff]
        %v378 = vld [vmem:[%s255 + $0x270] sm:$0xff]
        %v379 = vld [vmem:[%s255 + $0x278] sm:$0xff]
        %v380 = vld [vmem:[%s255 + $0x280] sm:$0xff]
        %v381 = vld [vmem:[%s255 + $0x288] sm:$0xff]
        %v382 = vld [vmem:[%s255 + $0x290] sm:$0xff]
        %v383 = vld [vmem:[%s255 + $0x298] sm:$0xff]
        %v384 = vld [vmem:[%s255 + $0x2a0] sm:$0xff]
        %v385 = vld [vmem:[%s255 + $0x2a8] sm:$0xff]
        %v386 = vld [vmem:[%s255 + $0x2b0] sm:$0xff]
        %v387 = vld [vmem:[%s255 + $0x2b8] sm:$0xff]
        %v388 = vld [vmem:[%s255 + $0x2c0] sm:$0xff]
        %v389 = vld [vmem:[%s255 + $0x2c8] sm:$0xff]
        %v390 = vld [vmem:[%s255 + $0x2d0] sm:$0xff]
        %v391 = vld [vmem:[%s255 + $0x2d8] sm:$0xff]
        %v392 = vld [vmem:[%s255 + $0x2e0] sm:$0xff]
        %v393 = vld [vmem:[%s255 + $0x2e8] sm:$0xff]
        %v394 = vld [vmem:[%s255 + $0x2f0] sm:$0xff]
        %v395 = vld [vmem:[%s255 + $0x2f8] sm:$0xff]
        %v396 = vld [vmem:[%s255 + $0x300] sm:$0xff]
        %v397 = vld [vmem:[%s255 + $0x308] sm:$0xff]
        %v398 = vld [vmem:[%s255 + $0x310] sm:$0xff]
        %v399 = vld [vmem:[%s255 + $0x318] sm:$0xff]
        %v400 = vld [vmem:[%s255 + $0x320] sm:$0xff]
        %v401 = vld [vmem:[%s255 + $0x328] sm:$0xff]
        %v402 = vld [vmem:[%s255 + $0x330] sm:$0xff]
        %v403 = vld [vmem:[%s255 + $0x338] sm:$0xff]
        %v404 = vld [vmem:[%s255 + $0x340] sm:$0xff]
        %v405 = vld [vmem:[%s255 + $0x348] sm:$0xff]
        %v406 = vld [vmem:[%s255 + $0x350] sm:$0xff]
        %v407 = vld [vmem:[%s255 + $0x358] sm:$0xff]
        %v408 = vld [vmem:[%s255 + $0x360] sm:$0xff]
        %v409 = vld [vmem:[%s255 + $0x368] sm:$0xff]
        %v410 = vld [vmem:[%s255 + $0x370] sm:$0xff]
        %v411 = vld [vmem:[%s255 + $0x378] sm:$0xff]
        %v412 = vld [vmem:[%s255 + $0x380] sm:$0xff]
        %v413 = vld [vmem:[%s255 + $0x388] sm:$0xff]
        %v414 = vld [vmem:[%s255 + $0x390] sm:$0xff]
        %v415 = vld [vmem:[%s255 + $0x398] sm:$0xff]
        %v416 = vld [vmem:[%s255 + $0x3a0] sm:$0xff]
        %v417 = vld [vmem:[%s255 + $0x3a8] sm:$0xff]
        %v418 = vld [vmem:[%s255 + $0x3b0] sm:$0xff]
        %v419 = vld [vmem:[%s255 + $0x3b8] sm:$0xff]
        %v420 = vld [vmem:[%s255 + $0x3c0] sm:$0xff]
        %v421 = vld [vmem:[%s255 + $0x3c8] sm:$0xff]
        %v422 = vld [vmem:[%s255 + $0x3d0] sm:$0xff]
        %v423 = vld [vmem:[%s255 + $0x3d8] sm:$0xff]
        %v424 = vld [vmem:[%s255 + $0x3e0] sm:$0xff]
        %v425 = vld [vmem:[%s255 + $0x3e8] sm:$0xff]
        %v426 = vld [vmem:[%s255 + $0x3f0] sm:$0xff]
        %v427 = vld [vmem:[%s255 + $0x3f8] sm:$0xff]
        %v428 = vld [vmem:[%s255 + $0x400] sm:$0xff]
        %v429 = vld [vmem:[%s255 + $0x408] sm:$0xff]
        %v430 = vld [vmem:[%s255 + $0x410] sm:$0xff]
        %v431 = vld [vmem:[%s255 + $0x418] sm:$0xff]
        %v432 = vld [vmem:[%s255 + $0x420] sm:$0xff]
        %v433 = vld [vmem:[%s255 + $0x428] sm:$0xff]
        %v434 = vld [vmem:[%s255 + $0x430] sm:$0xff]
        %v435 = vld [vmem:[%s255 + $0x438] sm:$0xff]
        %v436 = vld [vmem:[%s255 + $0x440] sm:$0xff]
        %v437 = vld [vmem:[%s255 + $0x448] sm:$0xff]
        %v438 = vld [vmem:[%s255 + $0x450] sm:$0xff]
        %v439 = vld [vmem:[%s255 + $0x458] sm:$0xff]
        %v440 = vld [vmem:[%s255 + $0x460] sm:$0xff]
        %v441 = vld [vmem:[%s255 + $0x468] sm:$0xff]
        %v442 = vld [vmem:[%s255 + $0x470] sm:$0xff]
        %v443 = vld [vmem:[%s255 + $0x478] sm:$0xff]
        %v444 = vld [vmem:[%s255 + $0x480] sm:$0xff]
        %v445 = vld [vmem:[%s255 + $0x488] sm:$0xff]
        %v446 = vld [vmem:[%s255 + $0x490] sm:$0xff]
        %v447 = vld [vmem:[%s255 + $0x498] sm:$0xff]
        %v448 = vld [vmem:[%s255 + $0x4a0] sm:$0xff]
        %v449 = vld [vmem:[%s255 + $0x4a8] sm:$0xff]
        %v450 = vld [vmem:[%s255 + $0x4b0] sm:$0xff]
        %v451 = vld [vmem:[%s255 + $0x4b8] sm:$0xff]
        %v452 = vld [vmem:[%s255 + $0x4c0] sm:$0xff]
        %v453 = vld [vmem:[%s255 + $0x4c8] sm:$0xff]
        %v454 = vld [vmem:[%s255 + $0x4d0] sm:$0xff]
        %v455 = vld [vmem:[%s255 + $0x4d8] sm:$0xff]
        %v456 = vld [vmem:[%s255 + $0x4e0] sm:$0xff]
        %v457 = vld [vmem:[%s255 + $0x4e8] sm:$0xff]
        %v458 = vld [vmem:[%s255 + $0x4f0] sm:$0xff]
        %v459 = vld [vmem:[%s255 + $0x4f8] sm:$0xff]
        %v460 = vld [vmem:[%s255 + $0x500] sm:$0xff]
        %v461 = vld [vmem:[%s255 + $0x508] sm:$0xff]
        %v462 = vld [vmem:[%s255 + $0x510] sm:$0xff]
        %v463 = vld [vmem:[%s255 + $0x518] sm:$0xff]
        %v464 = vld [vmem:[%s255 + $0x520] sm:$0xff]
        %v465 = vld [vmem:[%s255 + $0x528] sm:$0xff]
        %v466 = vld [vmem:[%s255 + $0x530] sm:$0xff]
        %v467 = vld [vmem:[%s255 + $0x538] sm:$0xff]
        %v468 = vld [vmem:[%s255 + $0x540] sm:$0xff]
        %v469 = vld [vmem:[%s255 + $0x548] sm:$0xff]
        %v470 = vld [vmem:[%s255 + $0x550] sm:$0xff]
        %v471 = vld [vmem:[%s255 + $0x558] sm:$0xff]
        %v472 = vld [vmem:[%s255 + $0x560] sm:$0xff]
        %v473 = vld [vmem:[%s255 + $0x568] sm:$0xff]
        %v474 = vld [vmem:[%s255 + $0x570] sm:$0xff]
        %v475 = vld [vmem:[%s255 + $0x578] sm:$0xff]
        %v476 = vld [vmem:[%s255 + $0x580] sm:$0xff]
        %v477 = vld [vmem:[%s255 + $0x588] sm:$0xff]
        %v478 = vld [vmem:[%s255 + $0x590] sm:$0xff]
        %v479 = vld [vmem:[%s255 + $0x598] sm:$0xff]
        %v480 = vld [vmem:[%s255 + $0x5a0] sm:$0xff]
        %v481 = vld [vmem:[%s255 + $0x5a8] sm:$0xff]
        %v482 = vld [vmem:[%s255 + $0x5b0] sm:$0xff]
        %v483 = vld [vmem:[%s255 + $0x5b8] sm:$0xff]
        %v484 = vld [vmem:[%s255 + $0x5c0] sm:$0xff]
        %v485 = vld [vmem:[%s255 + $0x5c8] sm:$0xff]
        %v486 = vld [vmem:[%s255 + $0x5d0] sm:$0xff]
        %v487 = vld [vmem:[%s255 + $0x5d8] sm:$0xff]
        %v488 = vld [vmem:[%s255 + $0x5e0] sm:$0xff]
        %v489 = vld [vmem:[%s255 + $0x5e8] sm:$0xff]
        %v490 = vld [vmem:[%s255 + $0x5f0] sm:$0xff]
        %v491 = vld [vmem:[%s255 + $0x5f8] sm:$0xff]
        %v492 = vld [vmem:[%s255 + $0x600] sm:$0xff]
        %v493 = vld [vmem:[%s255 + $0x608] sm:$0xff]
        %v494 = vld [vmem:[%s255 + $0x610] sm:$0xff]
        %v495 = vld [vmem:[%s255 + $0x618] sm:$0xff]
        %v496 = vld [vmem:[%s255 + $0x620] sm:$0xff]
        %v497 = vld [vmem:[%s255 + $0x628] sm:$0xff]
        %v498 = vld [vmem:[%s255 + $0x630] sm:$0xff]
        %v499 = vld [vmem:[%s255 + $0x638] sm:$0xff]
        %v500 = vld [vmem:[%s255 + $0x640] sm:$0xff]
        %v501 = vld [vmem:[%s255 + $0x648] sm:$0xff]
        %v502 = vld [vmem:[%s255 + $0x650] sm:$0xff]
        %v503 = vld [vmem:[%s255 + $0x658] sm:$0xff]
        %v504 = vld [vmem:[%s255 + $0x660] sm:$0xff]
        %v505 = vld [vmem:[%s255 + $0x668] sm:$0xff]
        %v506 = vld [vmem:[%s255 + $0x670] sm:$0xff]
        %v507 = vld [vmem:[%s255 + $0x678] sm:$0xff]
        %v508 = vld [vmem:[%s255 + $0x680] sm:$0xff]
        %v509 = vld [vmem:[%s255 + $0x688] sm:$0xff]
        %v510 = vld [vmem:[%s255 + $0x690] sm:$0xff]
        %v511 = vld [vmem:[%s255 + $0x698] sm:$0xff]
        %v512 = vld [vmem:[%s255 + $0x6a0] sm:$0xff]
        %v513 = vld [vmem:[%s255 + $0x6a8] sm:$0xff]
        %v514 = vld [vmem:[%s255 + $0x6b0] sm:$0xff]
        %v515 = vld [vmem:[%s255 + $0x6b8] sm:$0xff]
        %v516 = vld [vmem:[%s255 + $0x6c0] sm:$0xff]
        %v517 = vld [vmem:[%s255 + $0x6c8] sm:$0xff]
        %v518 = vld [vmem:[%s255 + $0x6d0] sm:$0xff]
        %v519 = vld [vmem:[%s255 + $0x6d8] sm:$0xff]
        %v520 = vld [vmem:[%s255 + $0x6e0] sm:$0xff]
        %v521 = vld [vmem:[%s255 + $0x6e8] sm:$0xff]
        %v522 = vld [vmem:[%s255 + $0x6f0] sm:$0xff]
        %v523 = vld [vmem:[%s255 + $0x6f8] sm:$0xff]
        %v524 = vld [vmem:[%s255 + $0x700] sm:$0xff]
        %v525 = vld [vmem:[%s255 + $0x708] sm:$0xff]
        %v526 = vld [vmem:[%s255 + $0x710] sm:$0xff]
        %v527 = vld [vmem:[%s255 + $0x718] sm:$0xff]
        %v528 = vld [vmem:[%s255 + $0x720] sm:$0xff]
        %v529 = vld [vmem:[%s255 + $0x728] sm:$0xff]
        %v530 = vld [vmem:[%s255 + $0x730] sm:$0xff]
        %v531 = vld [vmem:[%s255 + $0x738] sm:$0xff]
        %v532 = vld [vmem:[%s255 + $0x740] sm:$0xff]
        %v533 = vld [vmem:[%s255 + $0x748] sm:$0xff]
        %v534 = vld [vmem:[%s255 + $0x750] sm:$0xff]
        %v535 = vld [vmem:[%s255 + $0x758] sm:$0xff]
        %v536 = vld [vmem:[%s255 + $0x760] sm:$0xff]
        %v537 = vld [vmem:[%s255 + $0x768] sm:$0xff]
        %v538 = vld [vmem:[%s255 + $0x770] sm:$0xff]
        %v539 = vld [vmem:[%s255 + $0x778] sm:$0xff]
        %v540 = vld [vmem:[%s255 + $0x780] sm:$0xff]
        %v541 = vld [vmem:[%s255 + $0x788] sm:$0xff]
        %v542 = vld [vmem:[%s255 + $0x790] sm:$0xff]
        %v543 = vld [vmem:[%s255 + $0x798] sm:$0xff]
        %v544 = vld [vmem:[%s255 + $0x7a0] sm:$0xff]
        %v545 = vld [vmem:[%s255 + $0x7a8] sm:$0xff]
        %v546 = vld [vmem:[%s255 + $0x7b0] sm:$0xff]
        %v547 = vld [vmem:[%s255 + $0x7b8] sm:$0xff]
        %v548 = vld [vmem:[%s255 + $0x7c0] sm:$0xff]
        %v549 = vld [vmem:[%s255 + $0x7c8] sm:$0xff]
        %v550 = vld [vmem:[%s255 + $0x7d0] sm:$0xff]
        %v551 = vld [vmem:[%s255 + $0x7d8] sm:$0xff]
        %v552 = vld [vmem:[%s255 + $0x7e0] sm:$0xff]
        %v553 = vld [vmem:[%s255 + $0x7e8] sm:$0xff]
        %v554 = vld [vmem:[%s255 + $0x7f0] sm:$0xff]
        %v555 = vld [vmem:[%s255 + $0x7f8] sm:$0xff]
        %v556 = vld [vmem:[#allocation5] sm:$0xff]
        %v557 = vld [vmem:[#allocation5 + $0x8] sm:$0xff]
        %v558 = vld [vmem:[#allocation5 + $0x10] sm:$0xff]
        %v559 = vld [vmem:[#allocation5 + $0x18] sm:$0xff]
        %v560 = vld [vmem:[#allocation5 + $0x20] sm:$0xff]
        %v561 = vld [vmem:[#allocation5 + $0x28] sm:$0xff]
        %v562 = vld [vmem:[#allocation5 + $0x30] sm:$0xff]
        %v563 = vld [vmem:[#allocation5 + $0x38] sm:$0xff]
        %v564 = vld [vmem:[#allocation5 + $0x40] sm:$0xff]
        %v565 = vld [vmem:[#allocation5 + $0x48] sm:$0xff]
        %v566 = vld [vmem:[#allocation5 + $0x50] sm:$0xff]
        %v567 = vld [vmem:[#allocation5 + $0x58] sm:$0xff]
        %v568 = vld [vmem:[#allocation5 + $0x60] sm:$0xff]
        %v569 = vld [vmem:[#allocation5 + $0x68] sm:$0xff]
        %v570 = vld [vmem:[#allocation5 + $0x70] sm:$0xff]
        %v571 = vld [vmem:[#allocation5 + $0x78] sm:$0xff]
        %v572 = vld [vmem:[#allocation5 + $0x80] sm:$0xff]
        %v573 = vld [vmem:[#allocation5 + $0x88] sm:$0xff]
        %v574 = vld [vmem:[#allocation5 + $0x90] sm:$0xff]
        %v575 = vld [vmem:[#allocation5 + $0x98] sm:$0xff]
        %v576 = vld [vmem:[#allocation5 + $0xa0] sm:$0xff]
        %v577 = vld [vmem:[#allocation5 + $0xa8] sm:$0xff]
        %v578 = vld [vmem:[#allocation5 + $0xb0] sm:$0xff]
        %v579 = vld [vmem:[#allocation5 + $0xb8] sm:$0xff]
        %v580 = vld [vmem:[#allocation5 + $0xc0] sm:$0xff]
        %v581 = vld [vmem:[#allocation5 + $0xc8] sm:$0xff]
        %v582 = vld [vmem:[#allocation5 + $0xd0] sm:$0xff]
        %v583 = vld [vmem:[#allocation5 + $0xd8] sm:$0xff]
        %v584 = vld [vmem:[#allocation5 + $0xe0] sm:$0xff]
        %v585 = vld [vmem:[#allocation5 + $0xe8] sm:$0xff]
        %v586 = vld [vmem:[#allocation5 + $0xf0] sm:$0xff]
        %v587 = vld [vmem:[#allocation5 + $0xf8] sm:$0xff]
        %v588 = vld [vmem:[#allocation5 + $0x100] sm:$0xff]
        %v589 = vld [vmem:[#allocation5 + $0x108] sm:$0xff]
        %v590 = vld [vmem:[#allocation5 + $0x110] sm:$0xff]
        %v591 = vld [vmem:[#allocation5 + $0x118] sm:$0xff]
        %v592 = vld [vmem:[#allocation5 + $0x120] sm:$0xff]
        %v593 = vld [vmem:[#allocation5 + $0x128] sm:$0xff]
        %v594 = vld [vmem:[#allocation5 + $0x130] sm:$0xff]
        %v595 = vld [vmem:[#allocation5 + $0x138] sm:$0xff]
        %v596 = vld [vmem:[#allocation5 + $0x140] sm:$0xff]
        %v597 = vld [vmem:[#allocation5 + $0x148] sm:$0xff]
        %v598 = vld [vmem:[#allocation5 + $0x150] sm:$0xff]
        %v599 = vld [vmem:[#allocation5 + $0x158] sm:$0xff]
        %v600 = vld [vmem:[#allocation5 + $0x160] sm:$0xff]
        %v601 = vld [vmem:[#allocation5 + $0x168] sm:$0xff]
        %v602 = vld [vmem:[#allocation5 + $0x170] sm:$0xff]
        %v603 = vld [vmem:[#allocation5 + $0x178] sm:$0xff]
        %v604 = vld [vmem:[#allocation5 + $0x180] sm:$0xff]
        %v605 = vld [vmem:[#allocation5 + $0x188] sm:$0xff]
        %v606 = vld [vmem:[#allocation5 + $0x190] sm:$0xff]
        %v607 = vld [vmem:[#allocation5 + $0x198] sm:$0xff]
        %v608 = vld [vmem:[#allocation5 + $0x1a0] sm:$0xff]
        %v609 = vld [vmem:[#allocation5 + $0x1a8] sm:$0xff]
        %v610 = vld [vmem:[#allocation5 + $0x1b0] sm:$0xff]
        %v611 = vld [vmem:[#allocation5 + $0x1b8] sm:$0xff]
        %v612 = vld [vmem:[#allocation5 + $0x1c0] sm:$0xff]
        %v613 = vld [vmem:[#allocation5 + $0x1c8] sm:$0xff]
        %v614 = vld [vmem:[#allocation5 + $0x1d0] sm:$0xff]
        %v615 = vld [vmem:[#allocation5 + $0x1d8] sm:$0xff]
        %v616 = vld [vmem:[#allocation5 + $0x1e0] sm:$0xff]
        %v617 = vld [vmem:[#allocation5 + $0x1e8] sm:$0xff]
        %v618 = vld [vmem:[#allocation5 + $0x1f0] sm:$0xff]
        %v619 = vld [vmem:[#allocation5 + $0x1f8] sm:$0xff]
        %v620 = vld [vmem:[#allocation5 + $0x200] sm:$0xff]
        %v621 = vld [vmem:[#allocation5 + $0x208] sm:$0xff]
        %v622 = vld [vmem:[#allocation5 + $0x210] sm:$0xff]
        %v623 = vld [vmem:[#allocation5 + $0x218] sm:$0xff]
        %v624 = vld [vmem:[#allocation5 + $0x220] sm:$0xff]
        %v625 = vld [vmem:[#allocation5 + $0x228] sm:$0xff]
        %v626 = vld [vmem:[#allocation5 + $0x230] sm:$0xff]
        %v627 = vld [vmem:[#allocation5 + $0x238] sm:$0xff]
        %v628 = vld [vmem:[#allocation5 + $0x240] sm:$0xff]
        %v629 = vld [vmem:[#allocation5 + $0x248] sm:$0xff]
        %v630 = vld [vmem:[#allocation5 + $0x250] sm:$0xff]
        %v631 = vld [vmem:[#allocation5 + $0x258] sm:$0xff]
        %v632 = vld [vmem:[#allocation5 + $0x260] sm:$0xff]
        %v633 = vld [vmem:[#allocation5 + $0x268] sm:$0xff]
        %v634 = vld [vmem:[#allocation5 + $0x270] sm:$0xff]
        %v635 = vld [vmem:[#allocation5 + $0x278] sm:$0xff]
        %v636 = vld [vmem:[#allocation5 + $0x280] sm:$0xff]
        %v637 = vld [vmem:[#allocation5 + $0x288] sm:$0xff]
        %v638 = vld [vmem:[#allocation5 + $0x290] sm:$0xff]
        %v639 = vld [vmem:[#allocation5 + $0x298] sm:$0xff]
        %v640 = vld [vmem:[#allocation5 + $0x2a0] sm:$0xff]
        %v641 = vld [vmem:[#allocation5 + $0x2a8] sm:$0xff]
        %v642 = vld [vmem:[#allocation5 + $0x2b0] sm:$0xff]
        %v643 = vld [vmem:[#allocation5 + $0x2b8] sm:$0xff]
        %v644 = vld [vmem:[#allocation5 + $0x2c0] sm:$0xff]
        %v645 = vld [vmem:[#allocation5 + $0x2c8] sm:$0xff]
        %v646 = vld [vmem:[#allocation5 + $0x2d0] sm:$0xff]
        %v647 = vld [vmem:[#allocation5 + $0x2d8] sm:$0xff]
        %v648 = vld [vmem:[#allocation5 + $0x2e0] sm:$0xff]
        %v649 = vld [vmem:[#allocation5 + $0x2e8] sm:$0xff]
        %v650 = vld [vmem:[#allocation5 + $0x2f0] sm:$0xff]
        %v651 = vld [vmem:[#allocation5 + $0x2f8] sm:$0xff]
        %v652 = vld [vmem:[#allocation5 + $0x300] sm:$0xff]
        %v653 = vld [vmem:[#allocation5 + $0x308] sm:$0xff]
        %v654 = vld [vmem:[#allocation5 + $0x310] sm:$0xff]
        %v655 = vld [vmem:[#allocation5 + $0x318] sm:$0xff]
        %v656 = vld [vmem:[#allocation5 + $0x320] sm:$0xff]
        %v657 = vld [vmem:[#allocation5 + $0x328] sm:$0xff]
        %v658 = vld [vmem:[#allocation5 + $0x330] sm:$0xff]
        %v659 = vld [vmem:[#allocation5 + $0x338] sm:$0xff]
        %v660 = vld [vmem:[#allocation5 + $0x340] sm:$0xff]
        %v661 = vld [vmem:[#allocation5 + $0x348] sm:$0xff]
        %v662 = vld [vmem:[#allocation5 + $0x350] sm:$0xff]
        %v663 = vld [vmem:[#allocation5 + $0x358] sm:$0xff]
        %v664 = vld [vmem:[#allocation5 + $0x360] sm:$0xff]
        %v665 = vld [vmem:[#allocation5 + $0x368] sm:$0xff]
        %v666 = vld [vmem:[#allocation5 + $0x370] sm:$0xff]
        %v667 = vld [vmem:[#allocation5 + $0x378] sm:$0xff]
        %v668 = vld [vmem:[#allocation5 + $0x380] sm:$0xff]
        %v669 = vld [vmem:[#allocation5 + $0x388] sm:$0xff]
        %v670 = vld [vmem:[#allocation5 + $0x390] sm:$0xff]
        %v671 = vld [vmem:[#allocation5 + $0x398] sm:$0xff]
        %v672 = vld [vmem:[#allocation5 + $0x3a0] sm:$0xff]
        %v673 = vld [vmem:[#allocation5 + $0x3a8] sm:$0xff]
        %v674 = vld [vmem:[#allocation5 + $0x3b0] sm:$0xff]
        %v675 = vld [vmem:[#allocation5 + $0x3b8] sm:$0xff]
        %v676 = vld [vmem:[#allocation5 + $0x3c0] sm:$0xff]
        %v677 = vld [vmem:[#allocation5 + $0x3c8] sm:$0xff]
        %v678 = vld [vmem:[#allocation5 + $0x3d0] sm:$0xff]
        %v679 = vld [vmem:[#allocation5 + $0x3d8] sm:$0xff]
        %v680 = vld [vmem:[#allocation5 + $0x3e0] sm:$0xff]
        %v681 = vld [vmem:[#allocation5 + $0x3e8] sm:$0xff]
        %v682 = vld [vmem:[#allocation5 + $0x3f0] sm:$0xff]
        %v683 = vld [vmem:[#allocation5 + $0x3f8] sm:$0xff]
        %v684 = vld [vmem:[#allocation5 + $0x400] sm:$0xff]
        %v685 = vld [vmem:[#allocation5 + $0x408] sm:$0xff]
        %v686 = vld [vmem:[#allocation5 + $0x410] sm:$0xff]
        %v687 = vld [vmem:[#allocation5 + $0x418] sm:$0xff]
        %v688 = vld [vmem:[#allocation5 + $0x420] sm:$0xff]
        %v689 = vld [vmem:[#allocation5 + $0x428] sm:$0xff]
        %v690 = vld [vmem:[#allocation5 + $0x430] sm:$0xff]
        %v691 = vld [vmem:[#allocation5 + $0x438] sm:$0xff]
        %v692 = vld [vmem:[#allocation5 + $0x440] sm:$0xff]
        %v693 = vld [vmem:[#allocation5 + $0x448] sm:$0xff]
        %v694 = vld [vmem:[#allocation5 + $0x450] sm:$0xff]
        %v695 = vld [vmem:[#allocation5 + $0x458] sm:$0xff]
        %v696 = vld [vmem:[#allocation5 + $0x460] sm:$0xff]
        %v697 = vld [vmem:[#allocation5 + $0x468] sm:$0xff]
        %v698 = vld [vmem:[#allocation5 + $0x470] sm:$0xff]
        %v699 = vld [vmem:[#allocation5 + $0x478] sm:$0xff]
        %v700 = vld [vmem:[#allocation5 + $0x480] sm:$0xff]
        %v701 = vld [vmem:[#allocation5 + $0x488] sm:$0xff]
        %v702 = vld [vmem:[#allocation5 + $0x490] sm:$0xff]
        %v703 = vld [vmem:[#allocation5 + $0x498] sm:$0xff]
        %v704 = vld [vmem:[#allocation5 + $0x4a0] sm:$0xff]
        %v705 = vld [vmem:[#allocation5 + $0x4a8] sm:$0xff]
        %v706 = vld [vmem:[#allocation5 + $0x4b0] sm:$0xff]
        %v707 = vld [vmem:[#allocation5 + $0x4b8] sm:$0xff]
        %v708 = vld [vmem:[#allocation5 + $0x4c0] sm:$0xff]
        %v709 = vld [vmem:[#allocation5 + $0x4c8] sm:$0xff]
        %v710 = vld [vmem:[#allocation5 + $0x4d0] sm:$0xff]
        %v711 = vld [vmem:[#allocation5 + $0x4d8] sm:$0xff]
        %v712 = vld [vmem:[#allocation5 + $0x4e0] sm:$0xff]
        %v713 = vld [vmem:[#allocation5 + $0x4e8] sm:$0xff]
        %v714 = vld [vmem:[#allocation5 + $0x4f0] sm:$0xff]
        %v715 = vld [vmem:[#allocation5 + $0x4f8] sm:$0xff]
        %v716 = vld [vmem:[#allocation5 + $0x500] sm:$0xff]
        %v717 = vld [vmem:[#allocation5 + $0x508] sm:$0xff]
        %v718 = vld [vmem:[#allocation5 + $0x510] sm:$0xff]
        %v719 = vld [vmem:[#allocation5 + $0x518] sm:$0xff]
        %v720 = vld [vmem:[#allocation5 + $0x520] sm:$0xff]
        %v721 = vld [vmem:[#allocation5 + $0x528] sm:$0xff]
        %v722 = vld [vmem:[#allocation5 + $0x530] sm:$0xff]
        %v723 = vld [vmem:[#allocation5 + $0x538] sm:$0xff]
        %v724 = vld [vmem:[#allocation5 + $0x540] sm:$0xff]
        %v725 = vld [vmem:[#allocation5 + $0x548] sm:$0xff]
        %v726 = vld [vmem:[#allocation5 + $0x550] sm:$0xff]
        %v727 = vld [vmem:[#allocation5 + $0x558] sm:$0xff]
        %v728 = vld [vmem:[#allocation5 + $0x560] sm:$0xff]
        %v729 = vld [vmem:[#allocation5 + $0x568] sm:$0xff]
        %v730 = vld [vmem:[#allocation5 + $0x570] sm:$0xff]
        %v731 = vld [vmem:[#allocation5 + $0x578] sm:$0xff]
        %v732 = vld [vmem:[#allocation5 + $0x580] sm:$0xff]
        %v733 = vld [vmem:[#allocation5 + $0x588] sm:$0xff]
        %v734 = vld [vmem:[#allocation5 + $0x590] sm:$0xff]
        %v735 = vld [vmem:[#allocation5 + $0x598] sm:$0xff]
        %v736 = vld [vmem:[#allocation5 + $0x5a0] sm:$0xff]
        %v737 = vld [vmem:[#allocation5 + $0x5a8] sm:$0xff]
        %v738 = vld [vmem:[#allocation5 + $0x5b0] sm:$0xff]
        %v739 = vld [vmem:[#allocation5 + $0x5b8] sm:$0xff]
        %v740 = vld [vmem:[#allocation5 + $0x5c0] sm:$0xff]
        %v741 = vld [vmem:[#allocation5 + $0x5c8] sm:$0xff]
        %v742 = vld [vmem:[#allocation5 + $0x5d0] sm:$0xff]
        %v743 = vld [vmem:[#allocation5 + $0x5d8] sm:$0xff]
        %v744 = vld [vmem:[#allocation5 + $0x5e0] sm:$0xff]
        %v745 = vld [vmem:[#allocation5 + $0x5e8] sm:$0xff]
        %v746 = vld [vmem:[#allocation5 + $0x5f0] sm:$0xff]
        %v747 = vld [vmem:[#allocation5 + $0x5f8] sm:$0xff]
        %v748 = vld [vmem:[#allocation5 + $0x600] sm:$0xff]
        %v749 = vld [vmem:[#allocation5 + $0x608] sm:$0xff]
        %v750 = vld [vmem:[#allocation5 + $0x610] sm:$0xff]
        %v751 = vld [vmem:[#allocation5 + $0x618] sm:$0xff]
        %v752 = vld [vmem:[#allocation5 + $0x620] sm:$0xff]
        %v753 = vld [vmem:[#allocation5 + $0x628] sm:$0xff]
        %v754 = vld [vmem:[#allocation5 + $0x630] sm:$0xff]
        %v755 = vld [vmem:[#allocation5 + $0x638] sm:$0xff]
        %v756 = vld [vmem:[#allocation5 + $0x640] sm:$0xff]
        %v757 = vld [vmem:[#allocation5 + $0x648] sm:$0xff]
        %v758 = vld [vmem:[#allocation5 + $0x650] sm:$0xff]
        %v759 = vld [vmem:[#allocation5 + $0x658] sm:$0xff]
        %v760 = vld [vmem:[#allocation5 + $0x660] sm:$0xff]
        %v761 = vld [vmem:[#allocation5 + $0x668] sm:$0xff]
        %v762 = vld [vmem:[#allocation5 + $0x670] sm:$0xff]
        %v763 = vld [vmem:[#allocation5 + $0x678] sm:$0xff]
        %v764 = vld [vmem:[#allocation5 + $0x680] sm:$0xff]
        %v765 = vld [vmem:[#allocation5 + $0x688] sm:$0xff]
        %v766 = vld [vmem:[#allocation5 + $0x690] sm:$0xff]
        %v767 = vld [vmem:[#allocation5 + $0x698] sm:$0xff]
        %v768 = vld [vmem:[#allocation5 + $0x6a0] sm:$0xff]
        %v769 = vld [vmem:[#allocation5 + $0x6a8] sm:$0xff]
        %v770 = vld [vmem:[#allocation5 + $0x6b0] sm:$0xff]
        %v771 = vld [vmem:[#allocation5 + $0x6b8] sm:$0xff]
        %v772 = vld [vmem:[#allocation5 + $0x6c0] sm:$0xff]
        %v773 = vld [vmem:[#allocation5 + $0x6c8] sm:$0xff]
        %v774 = vld [vmem:[#allocation5 + $0x6d0] sm:$0xff]
        %v775 = vld [vmem:[#allocation5 + $0x6d8] sm:$0xff]
        %v776 = vld [vmem:[#allocation5 + $0x6e0] sm:$0xff]
        %v777 = vld [vmem:[#allocation5 + $0x6e8] sm:$0xff]
        %v778 = vld [vmem:[#allocation5 + $0x6f0] sm:$0xff]
        %v779 = vld [vmem:[#allocation5 + $0x6f8] sm:$0xff]
        %v780 = vld [vmem:[#allocation5 + $0x700] sm:$0xff]
        %v781 = vld [vmem:[#allocation5 + $0x708] sm:$0xff]
        %v782 = vld [vmem:[#allocation5 + $0x710] sm:$0xff]
        %v783 = vld [vmem:[#allocation5 + $0x718] sm:$0xff]
        %v784 = vld [vmem:[#allocation5 + $0x720] sm:$0xff]
        %v785 = vld [vmem:[#allocation5 + $0x728] sm:$0xff]
        %v786 = vld [vmem:[#allocation5 + $0x730] sm:$0xff]
        %v787 = vld [vmem:[#allocation5 + $0x738] sm:$0xff]
        %v788 = vld [vmem:[#allocation5 + $0x740] sm:$0xff]
        %v789 = vld [vmem:[#allocation5 + $0x748] sm:$0xff]
        %v790 = vld [vmem:[#allocation5 + $0x750] sm:$0xff]
        %v791 = vld [vmem:[#allocation5 + $0x758] sm:$0xff]
        %v792 = vld [vmem:[#allocation5 + $0x760] sm:$0xff]
        %v793 = vld [vmem:[#allocation5 + $0x768] sm:$0xff]
        %v794 = vld [vmem:[#allocation5 + $0x770] sm:$0xff]
        %v795 = vld [vmem:[#allocation5 + $0x778] sm:$0xff]
        %v796 = vld [vmem:[#allocation5 + $0x780] sm:$0xff]
        %v797 = vld [vmem:[#allocation5 + $0x788] sm:$0xff]
        %v798 = vld [vmem:[#allocation5 + $0x790] sm:$0xff]
        %v799 = vld [vmem:[#allocation5 + $0x798] sm:$0xff]
        %v800 = vld [vmem:[#allocation5 + $0x7a0] sm:$0xff]
        %v801 = vld [vmem:[#allocation5 + $0x7a8] sm:$0xff]
        %v802 = vld [vmem:[#allocation5 + $0x7b0] sm:$0xff]
        %v803 = vld [vmem:[#allocation5 + $0x7b8] sm:$0xff]
        %v804 = vld [vmem:[#allocation5 + $0x7c0] sm:$0xff]
        %v805 = vld [vmem:[#allocation5 + $0x7c8] sm:$0xff]
        %v806 = vld [vmem:[#allocation5 + $0x7d0] sm:$0xff]
        %v807 = vld [vmem:[#allocation5 + $0x7d8] sm:$0xff]
        %v808 = vld [vmem:[#allocation5 + $0x7e0] sm:$0xff]
        %v809 = vld [vmem:[#allocation5 + $0x7e8] sm:$0xff]
        %v810 = vld [vmem:[#allocation5 + $0x7f0] sm:$0xff]
        %v811 = vld [vmem:[#allocation5 + $0x7f8] sm:$0xff]
        %v812 = vld [vmem:[#allocation7] sm:$0x3]
        %v814 = vlaneseq
        %v815 = vshrl.u32 %v814, 7
        %v816 = vsub.s32 0, %v815
        %v817 = vrot.slane %v812, %v816
        %v818 = vlaneseq
        %v819 = vshrl.u32 %v818, 7
        %v820 = vsub.s32 1, %v819
        %v821 = vrot.slane %v812, %v820
        %824 = vmatprep.subr.mxu0 %v557
        %825 = vmatpush1.msra.mxu0 %v556
        %826 = vmatprep.subr.mxu0 %v559
        %827 = vmatpush1.msra.mxu0 %v558
        %828 = vmatprep.subr.mxu0 %v561
        %829 = vmatpush1.msra.mxu0 %v560
        %830 = vmatprep.subr.mxu0 %v563
        %831 = vmatpush1.msra.mxu0 %v562
        %832 = vmatprep.subr.mxu0 %v565
        %833 = vmatpush1.msra.mxu0 %v564
        %834 = vmatprep.subr.mxu0 %v567
        %835 = vmatpush1.msra.mxu0 %v566
        %836 = vmatprep.subr.mxu0 %v569
        %837 = vmatpush1.msra.mxu0 %v568
        %838 = vmatprep.subr.mxu0 %v571
        %839 = vmatpush1.msra.mxu0 %v570
        %840 = vmatprep.subr.mxu0 %v573
        %841 = vmatpush1.msra.mxu0 %v572
        %842 = vmatprep.subr.mxu0 %v575
        %843 = vmatpush1.msra.mxu0 %v574
        %844 = vmatprep.subr.mxu0 %v577
        %845 = vmatpush1.msra.mxu0 %v576
        %846 = vmatprep.subr.mxu0 %v579
        %847 = vmatpush1.msra.mxu0 %v578
        %848 = vmatprep.subr.mxu0 %v581
        %849 = vmatpush1.msra.mxu0 %v580
        %850 = vmatprep.subr.mxu0 %v583
        %851 = vmatpush1.msra.mxu0 %v582
        %852 = vmatprep.subr.mxu0 %v585
        %853 = vmatpush1.msra.mxu0 %v584
        %854 = vmatprep.subr.mxu0 %v587
        %855 = vmatpush1.msra.mxu0 %v586
        %856 = vmatprep.subr.mxu0 %v589
        %857 = vmatpush1.msra.mxu0 %v588
        %858 = vmatprep.subr.mxu0 %v591
        %859 = vmatpush1.msra.mxu0 %v590
        %860 = vmatprep.subr.mxu0 %v593
        %861 = vmatpush1.msra.mxu0 %v592
        %862 = vmatprep.subr.mxu0 %v595
        %863 = vmatpush1.msra.mxu0 %v594
        %864 = vmatprep.subr.mxu0 %v597
        %865 = vmatpush1.msra.mxu0 %v596
        %866 = vmatprep.subr.mxu0 %v599
        %867 = vmatpush1.msra.mxu0 %v598
        %868 = vmatprep.subr.mxu0 %v601
        %869 = vmatpush1.msra.mxu0 %v600
        %870 = vmatprep.subr.mxu0 %v603
        %871 = vmatpush1.msra.mxu0 %v602
        %872 = vmatprep.subr.mxu0 %v605
        %873 = vmatpush1.msra.mxu0 %v604
        %874 = vmatprep.subr.mxu0 %v607
        %875 = vmatpush1.msra.mxu0 %v606
        %876 = vmatprep.subr.mxu0 %v609
        %877 = vmatpush1.msra.mxu0 %v608
        %878 = vmatprep.subr.mxu0 %v611
        %879 = vmatpush1.msra.mxu0 %v610
        %880 = vmatprep.subr.mxu0 %v613
        %881 = vmatpush1.msra.mxu0 %v612
        %882 = vmatprep.subr.mxu0 %v615
        %883 = vmatpush1.msra.mxu0 %v614
        %884 = vmatprep.subr.mxu0 %v617
        %885 = vmatpush1.msra.mxu0 %v616
        %886 = vmatprep.subr.mxu0 %v619
        %887 = vmatpush1.msra.mxu0 %v618
        %888 = vmatprep.mubr.f32.mxu0 %v301
        %889 = vmatmul.mubr.f32.gmra.mrb[0].mxu0 %v300
        %v890 = vpop.f32.mrb[0].mxu0
        %v891 = vadd.f32 %v817, %v890
        %v892 = vpop.f32.mrb[0].mxu0
        %v893 = vadd.f32 %v821, %v892
        %894 = vmatprep.mubr.f32.mxu0 %v309
        %895 = vmatmul.mubr.f32.gmra.mrb[0].mxu0 %v308
        %v896 = vpop.f32.mrb[0].mxu0
        %v897 = vadd.f32 %v817, %v896
        %v898 = vpop.f32.mrb[0].mxu0
        %v899 = vadd.f32 %v821, %v898
        %900 = vmatprep.mubr.f32.mxu0 %v317
        %901 = vmatmul.mubr.f32.gmra.mrb[0].mxu0 %v316
        %v902 = vpop.f32.mrb[0].mxu0
        %v903 = vadd.f32 %v817, %v902
        %v904 = vpop.f32.mrb[0].mxu0
        %v905 = vadd.f32 %v821, %v904
        %906 = vmatprep.mubr.f32.mxu0 %v325
        %907 = vmatmul.mubr.f32.gmra.mrb[0].mxu0 %v324
        %v908 = vpop.f32.mrb[0].mxu0
        %v909 = vadd.f32 %v817, %v908
        %v910 = vpop.f32.mrb[0].mxu0
        %v911 = vadd.f32 %v821, %v910
        %912 = vmatprep.mubr.f32.mxu0 %v333
        %913 = vmatmul.mubr.f32.gmra.mrb[0].mxu0 %v332
        %v914 = vpop.f32.mrb[0].mxu0
        %v915 = vadd.f32 %v817, %v914
        %v916 = vpop.f32.mrb[0].mxu0
        %v917 = vadd.f32 %v821, %v916
        %918 = vmatprep.mubr.f32.mxu0 %v341
        %919 = vmatmul.mubr.f32.gmra.mrb[0].mxu0 %v340
        %v920 = vpop.f32.mrb[0].mxu0
        %v921 = vadd.f32 %v817, %v920
        %v922 = vpop.f32.mrb[0].mxu0
        %v923 = vadd.f32 %v821, %v922
        %924 = vmatprep.mubr.f32.mxu0 %v349
        %925 = vmatmul.mubr.f32.gmra.mrb[0].mxu0 %v348
        %v926 = vpop.f32.mrb[0].mxu0
        %v927 = vadd.f32 %v817, %v926
        %v928 = vpop.f32.mrb[0].mxu0
        %v929 = vadd.f32 %v821, %v928
        %930 = vmatprep.mubr.f32.mxu0 %v357
        %931 = vmatmul.mubr.f32.gmra.mrb[0].mxu0 %v356
        %v932 = vpop.f32.mrb[0].mxu0
        %v933 = vadd.f32 %v817, %v932
        %v934 = vpop.f32.mrb[0].mxu0
        %v935 = vadd.f32 %v821, %v934
        %936 = vmatprep.mubr.f32.mxu0 %v365
        %937 = vmatmul.mubr.f32.gmra.mrb[0].mxu0 %v364
        %v938 = vpop.f32.mrb[0].mxu0
        %v939 = vadd.f32 %v817, %v938
        %v940 = vpop.f32.mrb[0].mxu0
        %v941 = vadd.f32 %v821, %v940
        %942 = vmatprep.mubr.f32.mxu0 %v373
        %943 = vmatmul.mubr.f32.gmra.mrb[0].mxu0 %v372
        %v944 = vpop.f32.mrb[0].mxu0
        %v945 = vadd.f32 %v817, %v944
        %v946 = vpop.f32.mrb[0].mxu0
        %v947 = vadd.f32 %v821, %v946
        %948 = vmatprep.mubr.f32.mxu0 %v381
        %949 = vmatmul.mubr.f32.gmra.mrb[0].mxu0 %v380
        %v950 = vpop.f32.mrb[0].mxu0
        %v951 = vadd.f32 %v817, %v950
        %v952 = vpop.f32.mrb[0].mxu0
        %v953 = vadd.f32 %v821, %v952
        %954 = vmatprep.mubr.f32.mxu0 %v389
        %955 = vmatmul.mubr.f32.gmra.mrb[0].mxu0 %v388
        %v956 = vpop.f32.mrb[0].mxu0
        %v957 = vadd.f32 %v817, %v956
        %v958 = vpop.f32.mrb[0].mxu0
        %v959 = vadd.f32 %v821, %v958
        %960 = vmatprep.mubr.f32.mxu0 %v397
        %961 = vmatmul.mubr.f32.gmra.mrb[0].mxu0 %v396
        %v962 = vpop.f32.mrb[0].mxu0
        %v963 = vadd.f32 %v817, %v962
        %v964 = vpop.f32.mrb[0].mxu0
        %v965 = vadd.f32 %v821, %v964
        %966 = vmatprep.mubr.f32.mxu0 %v405
        %967 = vmatmul.mubr.f32.gmra.mrb[0].mxu0 %v404
        %v968 = vpop.f32.mrb[0].mxu0
        %v969 = vadd.f32 %v817, %v968
        %v970 = vpop.f32.mrb[0].mxu0
        %v971 = vadd.f32 %v821, %v970
        %972 = vmatprep.mubr.f32.mxu0 %v413
        %973 = vmatmul.mubr.f32.gmra.mrb[0].mxu0 %v412
        %v974 = vpop.f32.mrb[0].mxu0
        %v975 = vadd.f32 %v817, %v974
        %v976 = vpop.f32.mrb[0].mxu0
        %v977 = vadd.f32 %v821, %v976
        %978 = vmatprep.mubr.f32.mxu0 %v421
        %979 = vmatmul.mubr.f32.gmra.mrb[0].mxu0 %v420
        %v980 = vpop.f32.mrb[0].mxu0
        %v981 = vadd.f32 %v817, %v980
        %v982 = vpop.f32.mrb[0].mxu0
        %v983 = vadd.f32 %v821, %v982
        %984 = vmatprep.mubr.f32.mxu0 %v429
        %985 = vmatmul.mubr.f32.gmra.mrb[0].mxu0 %v428
        %v986 = vpop.f32.mrb[0].mxu0
        %v987 = vadd.f32 %v817, %v986
        %v988 = vpop.f32.mrb[0].mxu0
        %v989 = vadd.f32 %v821, %v988
        %990 = vmatprep.mubr.f32.mxu0 %v437
        %991 = vmatmul.mubr.f32.gmra.mrb[0].mxu0 %v436
        %v992 = vpop.f32.mrb[0].mxu0
        %v993 = vadd.f32 %v817, %v992
        %v994 = vpop.f32.mrb[0].mxu0
        %v995 = vadd.f32 %v821, %v994
        %996 = vmatprep.mubr.f32.mxu0 %v445
        %997 = vmatmul.mubr.f32.gmra.mrb[0].mxu0 %v444
        %v998 = vpop.f32.mrb[0].mxu0
        %v999 = vadd.f32 %v817, %v998
        %v1000 = vpop.f32.mrb[0].mxu0
        %v1001 = vadd.f32 %v821, %v1000
        %1002 = vmatprep.mubr.f32.mxu0 %v453
        %1003 = vmatmul.mubr.f32.gmra.mrb[0].mxu0 %v452
        %v1004 = vpop.f32.mrb[0].mxu0
        %v1005 = vadd.f32 %v817, %v1004
        %v1006 = vpop.f32.mrb[0].mxu0
        %v1007 = vadd.f32 %v821, %v1006
        %1008 = vmatprep.mubr.f32.mxu0 %v461
        %1009 = vmatmul.mubr.f32.gmra.mrb[0].mxu0 %v460
        %v1010 = vpop.f32.mrb[0].mxu0
        %v1011 = vadd.f32 %v817, %v1010
        %v1012 = vpop.f32.mrb[0].mxu0
        %v1013 = vadd.f32 %v821, %v1012
        %1014 = vmatprep.mubr.f32.mxu0 %v469
        %1015 = vmatmul.mubr.f32.gmra.mrb[0].mxu0 %v468
        %v1016 = vpop.f32.mrb[0].mxu0
        %v1017 = vadd.f32 %v817, %v1016
        %v1018 = vpop.f32.mrb[0].mxu0
        %v1019 = vadd.f32 %v821, %v1018
        %1020 = vmatprep.mubr.f32.mxu0 %v477
        %1021 = vmatmul.mubr.f32.gmra.mrb[0].mxu0 %v476
        %v1022 = vpop.f32.mrb[0].mxu0
        %v1023 = vadd.f32 %v817, %v1022
        %v1024 = vpop.f32.mrb[0].mxu0
        %v1025 = vadd.f32 %v821, %v1024
        %1026 = vmatprep.mubr.f32.mxu0 %v485
        %1027 = vmatmul.mubr.f32.gmra.mrb[0].mxu0 %v484
        %v1028 = vpop.f32.mrb[0].mxu0
        %v1029 = vadd.f32 %v817, %v1028
        %v1030 = vpop.f32.mrb[0].mxu0
        %v1031 = vadd.f32 %v821, %v1030
        %1032 = vmatprep.mubr.f32.mxu0 %v493
        %1033 = vmatmul.mubr.f32.gmra.mrb[0].mxu0 %v492
        %v1034 = vpop.f32.mrb[0].mxu0
        %v1035 = vadd.f32 %v817, %v1034
        %v1036 = vpop.f32.mrb[0].mxu0
        %v1037 = vadd.f32 %v821, %v1036
        %1038 = vmatprep.mubr.f32.mxu0 %v501
        %1039 = vmatmul.mubr.f32.gmra.mrb[0].mxu0 %v500
        %v1040 = vpop.f32.mrb[0].mxu0
        %v1041 = vadd.f32 %v817, %v1040
        %v1042 = vpop.f32.mrb[0].mxu0
        %v1043 = vadd.f32 %v821, %v1042
        %1044 = vmatprep.mubr.f32.mxu0 %v509
        %1045 = vmatmul.mubr.f32.gmra.mrb[0].mxu0 %v508
        %v1046 = vpop.f32.mrb[0].mxu0
        %v1047 = vadd.f32 %v817, %v1046
        %v1048 = vpop.f32.mrb[0].mxu0
        %v1049 = vadd.f32 %v821, %v1048
        %1050 = vmatprep.mubr.f32.mxu0 %v517
        %1051 = vmatmul.mubr.f32.gmra.mrb[0].mxu0 %v516
        %v1052 = vpop.f32.mrb[0].mxu0
        %v1053 = vadd.f32 %v817, %v1052
        %v1054 = vpop.f32.mrb[0].mxu0
        %v1055 = vadd.f32 %v821, %v1054
        %1056 = vmatprep.mubr.f32.mxu0 %v525
        %1057 = vmatmul.mubr.f32.gmra.mrb[0].mxu0 %v524
        %v1058 = vpop.f32.mrb[0].mxu0
        %v1059 = vadd.f32 %v817, %v1058
        %v1060 = vpop.f32.mrb[0].mxu0
        %v1061 = vadd.f32 %v821, %v1060
        %1062 = vmatprep.mubr.f32.mxu0 %v533
        %1063 = vmatmul.mubr.f32.gmra.mrb[0].mxu0 %v532
        %v1064 = vpop.f32.mrb[0].mxu0
        %v1065 = vadd.f32 %v817, %v1064
        %v1066 = vpop.f32.mrb[0].mxu0
        %v1067 = vadd.f32 %v821, %v1066
        %1068 = vmatprep.mubr.f32.mxu0 %v541
        %1069 = vmatmul.mubr.f32.gmra.mrb[0].mxu0 %v540
        %v1070 = vpop.f32.mrb[0].mxu0
        %v1071 = vadd.f32 %v817, %v1070
        %v1072 = vpop.f32.mrb[0].mxu0
        %v1073 = vadd.f32 %v821, %v1072
        %1074 = vmatprep.mubr.f32.mxu0 %v549
        %1075 = vmatmul.mubr.f32.gmra.mrb[0].mxu0 %v548
        %v1076 = vpop.f32.mrb[0].mxu0
        %v1077 = vadd.f32 %v817, %v1076
        %v1078 = vpop.f32.mrb[0].mxu0
        %v1079 = vadd.f32 %v821, %v1078
        %1080 = vdwg.mxu0
        %1081 = vmatprep.subr.mxu0 %v621
        %1082 = vmatpush1.msra.mxu0 %v620
        %1083 = vmatprep.subr.mxu0 %v623
        %1084 = vmatpush1.msra.mxu0 %v622
        %1085 = vmatprep.subr.mxu0 %v625
        %1086 = vmatpush1.msra.mxu0 %v624
        %1087 = vmatprep.subr.mxu0 %v627
        %1088 = vmatpush1.msra.mxu0 %v626
        %1089 = vmatprep.subr.mxu0 %v629
        %1090 = vmatpush1.msra.mxu0 %v628
        %1091 = vmatprep.subr.mxu0 %v631
        %1092 = vmatpush1.msra.mxu0 %v630
        %1093 = vmatprep.subr.mxu0 %v633
        %1094 = vmatpush1.msra.mxu0 %v632
        %1095 = vmatprep.subr.mxu0 %v635
        %1096 = vmatpush1.msra.mxu0 %v634
        %1097 = vmatprep.subr.mxu0 %v637
        %1098 = vmatpush1.msra.mxu0 %v636
        %1099 = vmatprep.subr.mxu0 %v639
        %1100 = vmatpush1.msra.mxu0 %v638
        %1101 = vmatprep.subr.mxu0 %v641
        %1102 = vmatpush1.msra.mxu0 %v640
        %1103 = vmatprep.subr.mxu0 %v643
        %1104 = vmatpush1.msra.mxu0 %v642
        %1105 = vmatprep.subr.mxu0 %v645
        %1106 = vmatpush1.msra.mxu0 %v644
        %1107 = vmatprep.subr.mxu0 %v647
        %1108 = vmatpush1.msra.mxu0 %v646
        %1109 = vmatprep.subr.mxu0 %v649
        %1110 = vmatpush1.msra.mxu0 %v648
        %1111 = vmatprep.subr.mxu0 %v651
        %1112 = vmatpush1.msra.mxu0 %v650
        %1113 = vmatprep.subr.mxu0 %v653
        %1114 = vmatpush1.msra.mxu0 %v652
        %1115 = vmatprep.subr.mxu0 %v655
        %1116 = vmatpush1.msra.mxu0 %v654
        %1117 = vmatprep.subr.mxu0 %v657
        %1118 = vmatpush1.msra.mxu0 %v656
        %1119 = vmatprep.subr.mxu0 %v659
        %1120 = vmatpush1.msra.mxu0 %v658
        %1121 = vmatprep.subr.mxu0 %v661
        %1122 = vmatpush1.msra.mxu0 %v660
        %1123 = vmatprep.subr.mxu0 %v663
        %1124 = vmatpush1.msra.mxu0 %v662
        %1125 = vmatprep.subr.mxu0 %v665
        %1126 = vmatpush1.msra.mxu0 %v664
        %1127 = vmatprep.subr.mxu0 %v667
        %1128 = vmatpush1.msra.mxu0 %v666
        %1129 = vmatprep.subr.mxu0 %v669
        %1130 = vmatpush1.msra.mxu0 %v668
        %1131 = vmatprep.subr.mxu0 %v671
        %1132 = vmatpush1.msra.mxu0 %v670
        %1133 = vmatprep.subr.mxu0 %v673
        %1134 = vmatpush1.msra.mxu0 %v672
        %1135 = vmatprep.subr.mxu0 %v675
        %1136 = vmatpush1.msra.mxu0 %v674
        %1137 = vmatprep.subr.mxu0 %v677
        %1138 = vmatpush1.msra.mxu0 %v676
        %1139 = vmatprep.subr.mxu0 %v679
        %1140 = vmatpush1.msra.mxu0 %v678
        %1141 = vmatprep.subr.mxu0 %v681
        %1142 = vmatpush1.msra.mxu0 %v680
        %1143 = vmatprep.subr.mxu0 %v683
        %1144 = vmatpush1.msra.mxu0 %v682
        %1145 = vmatprep.mubr.f32.mxu0 %v303
        %1146 = vmatmul.mubr.f32.gmra.mrb[0].mxu0 %v302
        %v1147 = vpop.f32.mrb[0].mxu0
        %v1148 = vadd.f32 %v891, %v1147
        %v1149 = vpop.f32.mrb[0].mxu0
        %v1150 = vadd.f32 %v893, %v1149
        %1151 = vmatprep.mubr.f32.mxu0 %v311
        %1152 = vmatmul.mubr.f32.gmra.mrb[0].mxu0 %v310
        %v1153 = vpop.f32.mrb[0].mxu0
        %v1154 = vadd.f32 %v897, %v1153
        %v1155 = vpop.f32.mrb[0].mxu0
        %v1156 = vadd.f32 %v899, %v1155
        %1157 = vmatprep.mubr.f32.mxu0 %v319
        %1158 = vmatmul.mubr.f32.gmra.mrb[0].mxu0 %v318
        %v1159 = vpop.f32.mrb[0].mxu0
        %v1160 = vadd.f32 %v903, %v1159
        %v1161 = vpop.f32.mrb[0].mxu0
        %v1162 = vadd.f32 %v905, %v1161
        %1163 = vmatprep.mubr.f32.mxu0 %v327
        %1164 = vmatmul.mubr.f32.gmra.mrb[0].mxu0 %v326
        %v1165 = vpop.f32.mrb[0].mxu0
        %v1166 = vadd.f32 %v909, %v1165
        %v1167 = vpop.f32.mrb[0].mxu0
        %v1168 = vadd.f32 %v911, %v1167
        %1169 = vmatprep.mubr.f32.mxu0 %v335
        %1170 = vmatmul.mubr.f32.gmra.mrb[0].mxu0 %v334
        %v1171 = vpop.f32.mrb[0].mxu0
        %v1172 = vadd.f32 %v915, %v1171
        %v1173 = vpop.f32.mrb[0].mxu0
        %v1174 = vadd.f32 %v917, %v1173
        %1175 = vmatprep.mubr.f32.mxu0 %v343
        %1176 = vmatmul.mubr.f32.gmra.mrb[0].mxu0 %v342
        %v1177 = vpop.f32.mrb[0].mxu0
        %v1178 = vadd.f32 %v921, %v1177
        %v1179 = vpop.f32.mrb[0].mxu0
        %v1180 = vadd.f32 %v923, %v1179
        %1181 = vmatprep.mubr.f32.mxu0 %v351
        %1182 = vmatmul.mubr.f32.gmra.mrb[0].mxu0 %v350
        %v1183 = vpop.f32.mrb[0].mxu0
        %v1184 = vadd.f32 %v927, %v1183
        %v1185 = vpop.f32.mrb[0].mxu0
        %v1186 = vadd.f32 %v929, %v1185
        %1187 = vmatprep.mubr.f32.mxu0 %v359
        %1188 = vmatmul.mubr.f32.gmra.mrb[0].mxu0 %v358
        %v1189 = vpop.f32.mrb[0].mxu0
        %v1190 = vadd.f32 %v933, %v1189
        %v1191 = vpop.f32.mrb[0].mxu0
        %v1192 = vadd.f32 %v935, %v1191
        %1193 = vmatprep.mubr.f32.mxu0 %v367
        %1194 = vmatmul.mubr.f32.gmra.mrb[0].mxu0 %v366
        %v1195 = vpop.f32.mrb[0].mxu0
        %v1196 = vadd.f32 %v939, %v1195
        %v1197 = vpop.f32.mrb[0].mxu0
        %v1198 = vadd.f32 %v941, %v1197
        %1199 = vmatprep.mubr.f32.mxu0 %v375
        %1200 = vmatmul.mubr.f32.gmra.mrb[0].mxu0 %v374
        %v1201 = vpop.f32.mrb[0].mxu0
        %v1202 = vadd.f32 %v945, %v1201
        %v1203 = vpop.f32.mrb[0].mxu0
        %v1204 = vadd.f32 %v947, %v1203
        %1205 = vmatprep.mubr.f32.mxu0 %v383
        %1206 = vmatmul.mubr.f32.gmra.mrb[0].mxu0 %v382
        %v1207 = vpop.f32.mrb[0].mxu0
        %v1208 = vadd.f32 %v951, %v1207
        %v1209 = vpop.f32.mrb[0].mxu0
        %v1210 = vadd.f32 %v953, %v1209
        %1211 = vmatprep.mubr.f32.mxu0 %v391
        %1212 = vmatmul.mubr.f32.gmra.mrb[0].mxu0 %v390
        %v1213 = vpop.f32.mrb[0].mxu0
        %v1214 = vadd.f32 %v957, %v1213
        %v1215 = vpop.f32.mrb[0].mxu0
        %v1216 = vadd.f32 %v959, %v1215
        %1217 = vmatprep.mubr.f32.mxu0 %v399
        %1218 = vmatmul.mubr.f32.gmra.mrb[0].mxu0 %v398
        %v1219 = vpop.f32.mrb[0].mxu0
        %v1220 = vadd.f32 %v963, %v1219
        %v1221 = vpop.f32.mrb[0].mxu0
        %v1222 = vadd.f32 %v965, %v1221
        %1223 = vmatprep.mubr.f32.mxu0 %v407
        %1224 = vmatmul.mubr.f32.gmra.mrb[0].mxu0 %v406
        %v1225 = vpop.f32.mrb[0].mxu0
        %v1226 = vadd.f32 %v969, %v1225
        %v1227 = vpop.f32.mrb[0].mxu0
        %v1228 = vadd.f32 %v971, %v1227
        %1229 = vmatprep.mubr.f32.mxu0 %v415
        %1230 = vmatmul.mubr.f32.gmra.mrb[0].mxu0 %v414
        %v1231 = vpop.f32.mrb[0].mxu0
        %v1232 = vadd.f32 %v975, %v1231
        %v1233 = vpop.f32.mrb[0].mxu0
        %v1234 = vadd.f32 %v977, %v1233
        %1235 = vmatprep.mubr.f32.mxu0 %v423
        %1236 = vmatmul.mubr.f32.gmra.mrb[0].mxu0 %v422
        %v1237 = vpop.f32.mrb[0].mxu0
        %v1238 = vadd.f32 %v981, %v1237
        %v1239 = vpop.f32.mrb[0].mxu0
        %v1240 = vadd.f32 %v983, %v1239
        %1241 = vmatprep.mubr.f32.mxu0 %v431
        %1242 = vmatmul.mubr.f32.gmra.mrb[0].mxu0 %v430
        %v1243 = vpop.f32.mrb[0].mxu0
        %v1244 = vadd.f32 %v987, %v1243
        %v1245 = vpop.f32.mrb[0].mxu0
        %v1246 = vadd.f32 %v989, %v1245
        %1247 = vmatprep.mubr.f32.mxu0 %v439
        %1248 = vmatmul.mubr.f32.gmra.mrb[0].mxu0 %v438
        %v1249 = vpop.f32.mrb[0].mxu0
        %v1250 = vadd.f32 %v993, %v1249
        %v1251 = vpop.f32.mrb[0].mxu0
        %v1252 = vadd.f32 %v995, %v1251
        %1253 = vmatprep.mubr.f32.mxu0 %v447
        %1254 = vmatmul.mubr.f32.gmra.mrb[0].mxu0 %v446
        %v1255 = vpop.f32.mrb[0].mxu0
        %v1256 = vadd.f32 %v999, %v1255
        %v1257 = vpop.f32.mrb[0].mxu0
        %v1258 = vadd.f32 %v1001, %v1257
        %1259 = vmatprep.mubr.f32.mxu0 %v455
        %1260 = vmatmul.mubr.f32.gmra.mrb[0].mxu0 %v454
        %v1261 = vpop.f32.mrb[0].mxu0
        %v1262 = vadd.f32 %v1005, %v1261
        %v1263 = vpop.f32.mrb[0].mxu0
        %v1264 = vadd.f32 %v1007, %v1263
        %1265 = vmatprep.mubr.f32.mxu0 %v463
        %1266 = vmatmul.mubr.f32.gmra.mrb[0].mxu0 %v462
        %v1267 = vpop.f32.mrb[0].mxu0
        %v1268 = vadd.f32 %v1011, %v1267
        %v1269 = vpop.f32.mrb[0].mxu0
        %v1270 = vadd.f32 %v1013, %v1269
        %1271 = vmatprep.mubr.f32.mxu0 %v471
        %1272 = vmatmul.mubr.f32.gmra.mrb[0].mxu0 %v470
        %v1273 = vpop.f32.mrb[0].mxu0
        %v1274 = vadd.f32 %v1017, %v1273
        %v1275 = vpop.f32.mrb[0].mxu0
        %v1276 = vadd.f32 %v1019, %v1275
        %1277 = vmatprep.mubr.f32.mxu0 %v479
        %1278 = vmatmul.mubr.f32.gmra.mrb[0].mxu0 %v478
        %v1279 = vpop.f32.mrb[0].mxu0
        %v1280 = vadd.f32 %v1023, %v1279
        %v1281 = vpop.f32.mrb[0].mxu0
        %v1282 = vadd.f32 %v1025, %v1281
        %1283 = vmatprep.mubr.f32.mxu0 %v487
        %1284 = vmatmul.mubr.f32.gmra.mrb[0].mxu0 %v486
        %v1285 = vpop.f32.mrb[0].mxu0
        %v1286 = vadd.f32 %v1029, %v1285
        %v1287 = vpop.f32.mrb[0].mxu0
        %v1288 = vadd.f32 %v1031, %v1287
        %1289 = vmatprep.mubr.f32.mxu0 %v495
        %1290 = vmatmul.mubr.f32.gmra.mrb[0].mxu0 %v494
        %v1291 = vpop.f32.mrb[0].mxu0
        %v1292 = vadd.f32 %v1035, %v1291
        %v1293 = vpop.f32.mrb[0].mxu0
        %v1294 = vadd.f32 %v1037, %v1293
        %1295 = vmatprep.mubr.f32.mxu0 %v503
        %1296 = vmatmul.mubr.f32.gmra.mrb[0].mxu0 %v502
        %v1297 = vpop.f32.mrb[0].mxu0
        %v1298 = vadd.f32 %v1041, %v1297
        %v1299 = vpop.f32.mrb[0].mxu0
        %v1300 = vadd.f32 %v1043, %v1299
        %1301 = vmatprep.mubr.f32.mxu0 %v511
        %1302 = vmatmul.mubr.f32.gmra.mrb[0].mxu0 %v510
        %v1303 = vpop.f32.mrb[0].mxu0
        %v1304 = vadd.f32 %v1047, %v1303
        %v1305 = vpop.f32.mrb[0].mxu0
        %v1306 = vadd.f32 %v1049, %v1305
        %1307 = vmatprep.mubr.f32.mxu0 %v519
        %1308 = vmatmul.mubr.f32.gmra.mrb[0].mxu0 %v518
        %v1309 = vpop.f32.mrb[0].mxu0
        %v1310 = vadd.f32 %v1053, %v1309
        %v1311 = vpop.f32.mrb[0].mxu0
        %v1312 = vadd.f32 %v1055, %v1311
        %1313 = vmatprep.mubr.f32.mxu0 %v527
        %1314 = vmatmul.mubr.f32.gmra.mrb[0].mxu0 %v526
        %v1315 = vpop.f32.mrb[0].mxu0
        %v1316 = vadd.f32 %v1059, %v1315
        %v1317 = vpop.f32.mrb[0].mxu0
        %v1318 = vadd.f32 %v1061, %v1317
        %1319 = vmatprep.mubr.f32.mxu0 %v535
        %1320 = vmatmul.mubr.f32.gmra.mrb[0].mxu0 %v534
        %v1321 = vpop.f32.mrb[0].mxu0
        %v1322 = vadd.f32 %v1065, %v1321
        %v1323 = vpop.f32.mrb[0].mxu0
        %v1324 = vadd.f32 %v1067, %v1323
        %1325 = vmatprep.mubr.f32.mxu0 %v543
        %1326 = vmatmul.mubr.f32.gmra.mrb[0].mxu0 %v542
        %v1327 = vpop.f32.mrb[0].mxu0
        %v1328 = vadd.f32 %v1071, %v1327
        %v1329 = vpop.f32.mrb[0].mxu0
        %v1330 = vadd.f32 %v1073, %v1329
        %1331 = vmatprep.mubr.f32.mxu0 %v551
        %1332 = vmatmul.mubr.f32.gmra.mrb[0].mxu0 %v550
        %v1333 = vpop.f32.mrb[0].mxu0
        %v1334 = vadd.f32 %v1077, %v1333
        %v1335 = vpop.f32.mrb[0].mxu0
        %v1336 = vadd.f32 %v1079, %v1335
        %1337 = vdwg.mxu0
        %1338 = vmatprep.subr.mxu0 %v685
        %1339 = vmatpush1.msra.mxu0 %v684
        %1340 = vmatprep.subr.mxu0 %v687
        %1341 = vmatpush1.msra.mxu0 %v686
        %1342 = vmatprep.subr.mxu0 %v689
        %1343 = vmatpush1.msra.mxu0 %v688
        %1344 = vmatprep.subr.mxu0 %v691
        %1345 = vmatpush1.msra.mxu0 %v690
        %1346 = vmatprep.subr.mxu0 %v693
        %1347 = vmatpush1.msra.mxu0 %v692
        %1348 = vmatprep.subr.mxu0 %v695
        %1349 = vmatpush1.msra.mxu0 %v694
        %1350 = vmatprep.subr.mxu0 %v697
        %1351 = vmatpush1.msra.mxu0 %v696
        %1352 = vmatprep.subr.mxu0 %v699
        %1353 = vmatpush1.msra.mxu0 %v698
        %1354 = vmatprep.subr.mxu0 %v701
        %1355 = vmatpush1.msra.mxu0 %v700
        %1356 = vmatprep.subr.mxu0 %v703
        %1357 = vmatpush1.msra.mxu0 %v702
        %1358 = vmatprep.subr.mxu0 %v705
        %1359 = vmatpush1.msra.mxu0 %v704
        %1360 = vmatprep.subr.mxu0 %v707
        %1361 = vmatpush1.msra.mxu0 %v706
        %1362 = vmatprep.subr.mxu0 %v709
        %1363 = vmatpush1.msra.mxu0 %v708
        %1364 = vmatprep.subr.mxu0 %v711
        %1365 = vmatpush1.msra.mxu0 %v710
        %1366 = vmatprep.subr.mxu0 %v713
        %1367 = vmatpush1.msra.mxu0 %v712
        %1368 = vmatprep.subr.mxu0 %v715
        %1369 = vmatpush1.msra.mxu0 %v714
        %1370 = vmatprep.subr.mxu0 %v717
        %1371 = vmatpush1.msra.mxu0 %v716
        %1372 = vmatprep.subr.mxu0 %v719
        %1373 = vmatpush1.msra.mxu0 %v718
        %1374 = vmatprep.subr.mxu0 %v721
        %1375 = vmatpush1.msra.mxu0 %v720
        %1376 = vmatprep.subr.mxu0 %v723
        %1377 = vmatpush1.msra.mxu0 %v722
        %1378 = vmatprep.subr.mxu0 %v725
        %1379 = vmatpush1.msra.mxu0 %v724
        %1380 = vmatprep.subr.mxu0 %v727
        %1381 = vmatpush1.msra.mxu0 %v726
        %1382 = vmatprep.subr.mxu0 %v729
        %1383 = vmatpush1.msra.mxu0 %v728
        %1384 = vmatprep.subr.mxu0 %v731
        %1385 = vmatpush1.msra.mxu0 %v730
        %1386 = vmatprep.subr.mxu0 %v733
        %1387 = vmatpush1.msra.mxu0 %v732
        %1388 = vmatprep.subr.mxu0 %v735
        %1389 = vmatpush1.msra.mxu0 %v734
        %1390 = vmatprep.subr.mxu0 %v737
        %1391 = vmatpush1.msra.mxu0 %v736
        %1392 = vmatprep.subr.mxu0 %v739
        %1393 = vmatpush1.msra.mxu0 %v738
        %1394 = vmatprep.subr.mxu0 %v741
        %1395 = vmatpush1.msra.mxu0 %v740
        %1396 = vmatprep.subr.mxu0 %v743
        %1397 = vmatpush1.msra.mxu0 %v742
        %1398 = vmatprep.subr.mxu0 %v745
        %1399 = vmatpush1.msra.mxu0 %v744
        %1400 = vmatprep.subr.mxu0 %v747
        %1401 = vmatpush1.msra.mxu0 %v746
        %1402 = vmatprep.mubr.f32.mxu0 %v305
        %1403 = vmatmul.mubr.f32.gmra.mrb[0].mxu0 %v304
        %v1404 = vpop.f32.mrb[0].mxu0
        %v1405 = vadd.f32 %v1148, %v1404
        %v1406 = vpop.f32.mrb[0].mxu0
        %v1407 = vadd.f32 %v1150, %v1406
        %1408 = vmatprep.mubr.f32.mxu0 %v313
        %1409 = vmatmul.mubr.f32.gmra.mrb[0].mxu0 %v312
        %v1410 = vpop.f32.mrb[0].mxu0
        %v1411 = vadd.f32 %v1154, %v1410
        %v1412 = vpop.f32.mrb[0].mxu0
        %v1413 = vadd.f32 %v1156, %v1412
        %1414 = vmatprep.mubr.f32.mxu0 %v321
        %1415 = vmatmul.mubr.f32.gmra.mrb[0].mxu0 %v320
        %v1416 = vpop.f32.mrb[0].mxu0
        %v1417 = vadd.f32 %v1160, %v1416
        %v1418 = vpop.f32.mrb[0].mxu0
        %v1419 = vadd.f32 %v1162, %v1418
        %1420 = vmatprep.mubr.f32.mxu0 %v329
        %1421 = vmatmul.mubr.f32.gmra.mrb[0].mxu0 %v328
        %v1422 = vpop.f32.mrb[0].mxu0
        %v1423 = vadd.f32 %v1166, %v1422
        %v1424 = vpop.f32.mrb[0].mxu0
        %v1425 = vadd.f32 %v1168, %v1424
        %1426 = vmatprep.mubr.f32.mxu0 %v337
        %1427 = vmatmul.mubr.f32.gmra.mrb[0].mxu0 %v336
        %v1428 = vpop.f32.mrb[0].mxu0
        %v1429 = vadd.f32 %v1172, %v1428
        %v1430 = vpop.f32.mrb[0].mxu0
        %v1431 = vadd.f32 %v1174, %v1430
        %1432 = vmatprep.mubr.f32.mxu0 %v345
        %1433 = vmatmul.mubr.f32.gmra.mrb[0].mxu0 %v344
        %v1434 = vpop.f32.mrb[0].mxu0
        %v1435 = vadd.f32 %v1178, %v1434
        %v1436 = vpop.f32.mrb[0].mxu0
        %v1437 = vadd.f32 %v1180, %v1436
        %1438 = vmatprep.mubr.f32.mxu0 %v353
        %1439 = vmatmul.mubr.f32.gmra.mrb[0].mxu0 %v352
        %v1440 = vpop.f32.mrb[0].mxu0
        %v1441 = vadd.f32 %v1184, %v1440
        %v1442 = vpop.f32.mrb[0].mxu0
        %v1443 = vadd.f32 %v1186, %v1442
        %1444 = vmatprep.mubr.f32.mxu0 %v361
        %1445 = vmatmul.mubr.f32.gmra.mrb[0].mxu0 %v360
        %v1446 = vpop.f32.mrb[0].mxu0
        %v1447 = vadd.f32 %v1190, %v1446
        %v1448 = vpop.f32.mrb[0].mxu0
        %v1449 = vadd.f32 %v1192, %v1448
        %1450 = vmatprep.mubr.f32.mxu0 %v369
        %1451 = vmatmul.mubr.f32.gmra.mrb[0].mxu0 %v368
        %v1452 = vpop.f32.mrb[0].mxu0
        %v1453 = vadd.f32 %v1196, %v1452
        %v1454 = vpop.f32.mrb[0].mxu0
        %v1455 = vadd.f32 %v1198, %v1454
        %1456 = vmatprep.mubr.f32.mxu0 %v377
        %1457 = vmatmul.mubr.f32.gmra.mrb[0].mxu0 %v376
        %v1458 = vpop.f32.mrb[0].mxu0
        %v1459 = vadd.f32 %v1202, %v1458
        %v1460 = vpop.f32.mrb[0].mxu0
        %v1461 = vadd.f32 %v1204, %v1460
        %1462 = vmatprep.mubr.f32.mxu0 %v385
        %1463 = vmatmul.mubr.f32.gmra.mrb[0].mxu0 %v384
        %v1464 = vpop.f32.mrb[0].mxu0
        %v1465 = vadd.f32 %v1208, %v1464
        %v1466 = vpop.f32.mrb[0].mxu0
        %v1467 = vadd.f32 %v1210, %v1466
        %1468 = vmatprep.mubr.f32.mxu0 %v393
        %1469 = vmatmul.mubr.f32.gmra.mrb[0].mxu0 %v392
        %v1470 = vpop.f32.mrb[0].mxu0
        %v1471 = vadd.f32 %v1214, %v1470
        %v1472 = vpop.f32.mrb[0].mxu0
        %v1473 = vadd.f32 %v1216, %v1472
        %1474 = vmatprep.mubr.f32.mxu0 %v401
        %1475 = vmatmul.mubr.f32.gmra.mrb[0].mxu0 %v400
        %v1476 = vpop.f32.mrb[0].mxu0
        %v1477 = vadd.f32 %v1220, %v1476
        %v1478 = vpop.f32.mrb[0].mxu0
        %v1479 = vadd.f32 %v1222, %v1478
        %1480 = vmatprep.mubr.f32.mxu0 %v409
        %1481 = vmatmul.mubr.f32.gmra.mrb[0].mxu0 %v408
        %v1482 = vpop.f32.mrb[0].mxu0
        %v1483 = vadd.f32 %v1226, %v1482
        %v1484 = vpop.f32.mrb[0].mxu0
        %v1485 = vadd.f32 %v1228, %v1484
        %1486 = vmatprep.mubr.f32.mxu0 %v417
        %1487 = vmatmul.mubr.f32.gmra.mrb[0].mxu0 %v416
        %v1488 = vpop.f32.mrb[0].mxu0
        %v1489 = vadd.f32 %v1232, %v1488
        %v1490 = vpop.f32.mrb[0].mxu0
        %v1491 = vadd.f32 %v1234, %v1490
        %1492 = vmatprep.mubr.f32.mxu0 %v425
        %1493 = vmatmul.mubr.f32.gmra.mrb[0].mxu0 %v424
        %v1494 = vpop.f32.mrb[0].mxu0
        %v1495 = vadd.f32 %v1238, %v1494
        %v1496 = vpop.f32.mrb[0].mxu0
        %v1497 = vadd.f32 %v1240, %v1496
        %1498 = vmatprep.mubr.f32.mxu0 %v433
        %1499 = vmatmul.mubr.f32.gmra.mrb[0].mxu0 %v432
        %v1500 = vpop.f32.mrb[0].mxu0
        %v1501 = vadd.f32 %v1244, %v1500
        %v1502 = vpop.f32.mrb[0].mxu0
        %v1503 = vadd.f32 %v1246, %v1502
        %1504 = vmatprep.mubr.f32.mxu0 %v441
        %1505 = vmatmul.mubr.f32.gmra.mrb[0].mxu0 %v440
        %v1506 = vpop.f32.mrb[0].mxu0
        %v1507 = vadd.f32 %v1250, %v1506
        %v1508 = vpop.f32.mrb[0].mxu0
        %v1509 = vadd.f32 %v1252, %v1508
        %1510 = vmatprep.mubr.f32.mxu0 %v449
        %1511 = vmatmul.mubr.f32.gmra.mrb[0].mxu0 %v448
        %v1512 = vpop.f32.mrb[0].mxu0
        %v1513 = vadd.f32 %v1256, %v1512
        %v1514 = vpop.f32.mrb[0].mxu0
        %v1515 = vadd.f32 %v1258, %v1514
        %1516 = vmatprep.mubr.f32.mxu0 %v457
        %1517 = vmatmul.mubr.f32.gmra.mrb[0].mxu0 %v456
        %v1518 = vpop.f32.mrb[0].mxu0
        %v1519 = vadd.f32 %v1262, %v1518
        %v1520 = vpop.f32.mrb[0].mxu0
        %v1521 = vadd.f32 %v1264, %v1520
        %1522 = vmatprep.mubr.f32.mxu0 %v465
        %1523 = vmatmul.mubr.f32.gmra.mrb[0].mxu0 %v464
        %v1524 = vpop.f32.mrb[0].mxu0
        %v1525 = vadd.f32 %v1268, %v1524
        %v1526 = vpop.f32.mrb[0].mxu0
        %v1527 = vadd.f32 %v1270, %v1526
        %1528 = vmatprep.mubr.f32.mxu0 %v473
        %1529 = vmatmul.mubr.f32.gmra.mrb[0].mxu0 %v472
        %v1530 = vpop.f32.mrb[0].mxu0
        %v1531 = vadd.f32 %v1274, %v1530
        %v1532 = vpop.f32.mrb[0].mxu0
        %v1533 = vadd.f32 %v1276, %v1532
        %1534 = vmatprep.mubr.f32.mxu0 %v481
        %1535 = vmatmul.mubr.f32.gmra.mrb[0].mxu0 %v480
        %v1536 = vpop.f32.mrb[0].mxu0
        %v1537 = vadd.f32 %v1280, %v1536
        %v1538 = vpop.f32.mrb[0].mxu0
        %v1539 = vadd.f32 %v1282, %v1538
        %1540 = vmatprep.mubr.f32.mxu0 %v489
        %1541 = vmatmul.mubr.f32.gmra.mrb[0].mxu0 %v488
        %v1542 = vpop.f32.mrb[0].mxu0
        %v1543 = vadd.f32 %v1286, %v1542
        %v1544 = vpop.f32.mrb[0].mxu0
        %v1545 = vadd.f32 %v1288, %v1544
        %1546 = vmatprep.mubr.f32.mxu0 %v497
        %1547 = vmatmul.mubr.f32.gmra.mrb[0].mxu0 %v496
        %v1548 = vpop.f32.mrb[0].mxu0
        %v1549 = vadd.f32 %v1292, %v1548
        %v1550 = vpop.f32.mrb[0].mxu0
        %v1551 = vadd.f32 %v1294, %v1550
        %1552 = vmatprep.mubr.f32.mxu0 %v505
        %1553 = vmatmul.mubr.f32.gmra.mrb[0].mxu0 %v504
        %v1554 = vpop.f32.mrb[0].mxu0
        %v1555 = vadd.f32 %v1298, %v1554
        %v1556 = vpop.f32.mrb[0].mxu0
        %v1557 = vadd.f32 %v1300, %v1556
        %1558 = vmatprep.mubr.f32.mxu0 %v513
        %1559 = vmatmul.mubr.f32.gmra.mrb[0].mxu0 %v512
        %v1560 = vpop.f32.mrb[0].mxu0
        %v1561 = vadd.f32 %v1304, %v1560
        %v1562 = vpop.f32.mrb[0].mxu0
        %v1563 = vadd.f32 %v1306, %v1562
        %1564 = vmatprep.mubr.f32.mxu0 %v521
        %1565 = vmatmul.mubr.f32.gmra.mrb[0].mxu0 %v520
        %v1566 = vpop.f32.mrb[0].mxu0
        %v1567 = vadd.f32 %v1310, %v1566
        %v1568 = vpop.f32.mrb[0].mxu0
        %v1569 = vadd.f32 %v1312, %v1568
        %1570 = vmatprep.mubr.f32.mxu0 %v529
        %1571 = vmatmul.mubr.f32.gmra.mrb[0].mxu0 %v528
        %v1572 = vpop.f32.mrb[0].mxu0
        %v1573 = vadd.f32 %v1316, %v1572
        %v1574 = vpop.f32.mrb[0].mxu0
        %v1575 = vadd.f32 %v1318, %v1574
        %1576 = vmatprep.mubr.f32.mxu0 %v537
        %1577 = vmatmul.mubr.f32.gmra.mrb[0].mxu0 %v536
        %v1578 = vpop.f32.mrb[0].mxu0
        %v1579 = vadd.f32 %v1322, %v1578
        %v1580 = vpop.f32.mrb[0].mxu0
        %v1581 = vadd.f32 %v1324, %v1580
        %1582 = vmatprep.mubr.f32.mxu0 %v545
        %1583 = vmatmul.mubr.f32.gmra.mrb[0].mxu0 %v544
        %v1584 = vpop.f32.mrb[0].mxu0
        %v1585 = vadd.f32 %v1328, %v1584
        %v1586 = vpop.f32.mrb[0].mxu0
        %v1587 = vadd.f32 %v1330, %v1586
        %1588 = vmatprep.mubr.f32.mxu0 %v553
        %1589 = vmatmul.mubr.f32.gmra.mrb[0].mxu0 %v552
        %v1590 = vpop.f32.mrb[0].mxu0
        %v1591 = vadd.f32 %v1334, %v1590
        %v1592 = vpop.f32.mrb[0].mxu0
        %v1593 = vadd.f32 %v1336, %v1592
        %1594 = vdwg.mxu0
        %1595 = vmatprep.subr.mxu0 %v749
        %1596 = vmatpush1.msra.mxu0 %v748
        %1597 = vmatprep.subr.mxu0 %v751
        %1598 = vmatpush1.msra.mxu0 %v750
        %1599 = vmatprep.subr.mxu0 %v753
        %1600 = vmatpush1.msra.mxu0 %v752
        %1601 = vmatprep.subr.mxu0 %v755
        %1602 = vmatpush1.msra.mxu0 %v754
        %1603 = vmatprep.subr.mxu0 %v757
        %1604 = vmatpush1.msra.mxu0 %v756
        %1605 = vmatprep.subr.mxu0 %v759
        %1606 = vmatpush1.msra.mxu0 %v758
        %1607 = vmatprep.subr.mxu0 %v761
        %1608 = vmatpush1.msra.mxu0 %v760
        %1609 = vmatprep.subr.mxu0 %v763
        %1610 = vmatpush1.msra.mxu0 %v762
        %1611 = vmatprep.subr.mxu0 %v765
        %1612 = vmatpush1.msra.mxu0 %v764
        %1613 = vmatprep.subr.mxu0 %v767
        %1614 = vmatpush1.msra.mxu0 %v766
        %1615 = vmatprep.subr.mxu0 %v769
        %1616 = vmatpush1.msra.mxu0 %v768
        %1617 = vmatprep.subr.mxu0 %v771
        %1618 = vmatpush1.msra.mxu0 %v770
        %1619 = vmatprep.subr.mxu0 %v773
        %1620 = vmatpush1.msra.mxu0 %v772
        %1621 = vmatprep.subr.mxu0 %v775
        %1622 = vmatpush1.msra.mxu0 %v774
        %1623 = vmatprep.subr.mxu0 %v777
        %1624 = vmatpush1.msra.mxu0 %v776
        %1625 = vmatprep.subr.mxu0 %v779
        %1626 = vmatpush1.msra.mxu0 %v778
        %1627 = vmatprep.subr.mxu0 %v781
        %1628 = vmatpush1.msra.mxu0 %v780
        %1629 = vmatprep.subr.mxu0 %v783
        %1630 = vmatpush1.msra.mxu0 %v782
        %1631 = vmatprep.subr.mxu0 %v785
        %1632 = vmatpush1.msra.mxu0 %v784
        %1633 = vmatprep.subr.mxu0 %v787
        %1634 = vmatpush1.msra.mxu0 %v786
        %1635 = vmatprep.subr.mxu0 %v789
        %1636 = vmatpush1.msra.mxu0 %v788
        %1637 = vmatprep.subr.mxu0 %v791
        %1638 = vmatpush1.msra.mxu0 %v790
        %1639 = vmatprep.subr.mxu0 %v793
        %1640 = vmatpush1.msra.mxu0 %v792
        %1641 = vmatprep.subr.mxu0 %v795
        %1642 = vmatpush1.msra.mxu0 %v794
        %1643 = vmatprep.subr.mxu0 %v797
        %1644 = vmatpush1.msra.mxu0 %v796
        %1645 = vmatprep.subr.mxu0 %v799
        %1646 = vmatpush1.msra.mxu0 %v798
        %1647 = vmatprep.subr.mxu0 %v801
        %1648 = vmatpush1.msra.mxu0 %v800
        %1649 = vmatprep.subr.mxu0 %v803
        %1650 = vmatpush1.msra.mxu0 %v802
        %1651 = vmatprep.subr.mxu0 %v805
        %1652 = vmatpush1.msra.mxu0 %v804
        %1653 = vmatprep.subr.mxu0 %v807
        %1654 = vmatpush1.msra.mxu0 %v806
        %1655 = vmatprep.subr.mxu0 %v809
        %1656 = vmatpush1.msra.mxu0 %v808
        %1657 = vmatprep.subr.mxu0 %v811
        %1658 = vmatpush1.msra.mxu0 %v810
        %1659 = vmatprep.mubr.f32.mxu0 %v307
        %1660 = vmatmul.mubr.f32.gmra.mrb[0].mxu0 %v306
        %v1661 = vpop.f32.mrb[0].mxu0
        %v1662 = vadd.f32 %v1405, %v1661
        %v1663 = vpop.f32.mrb[0].mxu0
        %v1664 = vadd.f32 %v1407, %v1663
        %1665 = vmatprep.mubr.f32.mxu0 %v315
        %1666 = vmatmul.mubr.f32.gmra.mrb[0].mxu0 %v314
        %v1667 = vpop.f32.mrb[0].mxu0
        %v1668 = vadd.f32 %v1411, %v1667
        %v1669 = vpop.f32.mrb[0].mxu0
        %v1670 = vadd.f32 %v1413, %v1669
        %1671 = vmatprep.mubr.f32.mxu0 %v323
        %1672 = vmatmul.mubr.f32.gmra.mrb[0].mxu0 %v322
        %v1673 = vpop.f32.mrb[0].mxu0
        %v1674 = vadd.f32 %v1417, %v1673
        %v1675 = vpop.f32.mrb[0].mxu0
        %v1676 = vadd.f32 %v1419, %v1675
        %1677 = vmatprep.mubr.f32.mxu0 %v331
        %1678 = vmatmul.mubr.f32.gmra.mrb[0].mxu0 %v330
        %v1679 = vpop.f32.mrb[0].mxu0
        %v1680 = vadd.f32 %v1423, %v1679
        %v1681 = vpop.f32.mrb[0].mxu0
        %v1682 = vadd.f32 %v1425, %v1681
        %1683 = vmatprep.mubr.f32.mxu0 %v339
        %1684 = vmatmul.mubr.f32.gmra.mrb[0].mxu0 %v338
        %v1685 = vpop.f32.mrb[0].mxu0
        %v1686 = vadd.f32 %v1429, %v1685
        %v1687 = vpop.f32.mrb[0].mxu0
        %v1688 = vadd.f32 %v1431, %v1687
        %1689 = vmatprep.mubr.f32.mxu0 %v347
        %1690 = vmatmul.mubr.f32.gmra.mrb[0].mxu0 %v346
        %v1691 = vpop.f32.mrb[0].mxu0
        %v1692 = vadd.f32 %v1435, %v1691
        %v1693 = vpop.f32.mrb[0].mxu0
        %v1694 = vadd.f32 %v1437, %v1693
        %1695 = vmatprep.mubr.f32.mxu0 %v355
        %1696 = vmatmul.mubr.f32.gmra.mrb[0].mxu0 %v354
        %v1697 = vpop.f32.mrb[0].mxu0
        %v1698 = vadd.f32 %v1441, %v1697
        %v1699 = vpop.f32.mrb[0].mxu0
        %v1700 = vadd.f32 %v1443, %v1699
        %1701 = vmatprep.mubr.f32.mxu0 %v363
        %1702 = vmatmul.mubr.f32.gmra.mrb[0].mxu0 %v362
        %v1703 = vpop.f32.mrb[0].mxu0
        %v1704 = vadd.f32 %v1447, %v1703
        %v1705 = vpop.f32.mrb[0].mxu0
        %v1706 = vadd.f32 %v1449, %v1705
        %1707 = vmatprep.mubr.f32.mxu0 %v371
        %1708 = vmatmul.mubr.f32.gmra.mrb[0].mxu0 %v370
        %v1709 = vpop.f32.mrb[0].mxu0
        %v1710 = vadd.f32 %v1453, %v1709
        %v1711 = vpop.f32.mrb[0].mxu0
        %v1712 = vadd.f32 %v1455, %v1711
        %1713 = vmatprep.mubr.f32.mxu0 %v379
        %1714 = vmatmul.mubr.f32.gmra.mrb[0].mxu0 %v378
        %v1715 = vpop.f32.mrb[0].mxu0
        %v1716 = vadd.f32 %v1459, %v1715
        %v1717 = vpop.f32.mrb[0].mxu0
        %v1718 = vadd.f32 %v1461, %v1717
        %1719 = vmatprep.mubr.f32.mxu0 %v387
        %1720 = vmatmul.mubr.f32.gmra.mrb[0].mxu0 %v386
        %v1721 = vpop.f32.mrb[0].mxu0
        %v1722 = vadd.f32 %v1465, %v1721
        %v1723 = vpop.f32.mrb[0].mxu0
        %v1724 = vadd.f32 %v1467, %v1723
        %1725 = vmatprep.mubr.f32.mxu0 %v395
        %1726 = vmatmul.mubr.f32.gmra.mrb[0].mxu0 %v394
        %v1727 = vpop.f32.mrb[0].mxu0
        %v1728 = vadd.f32 %v1471, %v1727
        %v1729 = vpop.f32.mrb[0].mxu0
        %v1730 = vadd.f32 %v1473, %v1729
        %1731 = vmatprep.mubr.f32.mxu0 %v403
        %1732 = vmatmul.mubr.f32.gmra.mrb[0].mxu0 %v402
        %v1733 = vpop.f32.mrb[0].mxu0
        %v1734 = vadd.f32 %v1477, %v1733
        %v1735 = vpop.f32.mrb[0].mxu0
        %v1736 = vadd.f32 %v1479, %v1735
        %1737 = vmatprep.mubr.f32.mxu0 %v411
        %1738 = vmatmul.mubr.f32.gmra.mrb[0].mxu0 %v410
        %v1739 = vpop.f32.mrb[0].mxu0
        %v1740 = vadd.f32 %v1483, %v1739
        %v1741 = vpop.f32.mrb[0].mxu0
        %v1742 = vadd.f32 %v1485, %v1741
        %1743 = vmatprep.mubr.f32.mxu0 %v419
        %1744 = vmatmul.mubr.f32.gmra.mrb[0].mxu0 %v418
        %v1745 = vpop.f32.mrb[0].mxu0
        %v1746 = vadd.f32 %v1489, %v1745
        %v1747 = vpop.f32.mrb[0].mxu0
        %v1748 = vadd.f32 %v1491, %v1747
        %1749 = vmatprep.mubr.f32.mxu0 %v427
        %1750 = vmatmul.mubr.f32.gmra.mrb[0].mxu0 %v426
        %v1751 = vpop.f32.mrb[0].mxu0
        %v1752 = vadd.f32 %v1495, %v1751
        %v1753 = vpop.f32.mrb[0].mxu0
        %v1754 = vadd.f32 %v1497, %v1753
        %1755 = vmatprep.mubr.f32.mxu0 %v435
        %1756 = vmatmul.mubr.f32.gmra.mrb[0].mxu0 %v434
        %v1757 = vpop.f32.mrb[0].mxu0
        %v1758 = vadd.f32 %v1501, %v1757
        %v1759 = vpop.f32.mrb[0].mxu0
        %v1760 = vadd.f32 %v1503, %v1759
        %1761 = vmatprep.mubr.f32.mxu0 %v443
        %1762 = vmatmul.mubr.f32.gmra.mrb[0].mxu0 %v442
        %v1763 = vpop.f32.mrb[0].mxu0
        %v1764 = vadd.f32 %v1507, %v1763
        %v1765 = vpop.f32.mrb[0].mxu0
        %v1766 = vadd.f32 %v1509, %v1765
        %1767 = vmatprep.mubr.f32.mxu0 %v451
        %1768 = vmatmul.mubr.f32.gmra.mrb[0].mxu0 %v450
        %v1769 = vpop.f32.mrb[0].mxu0
        %v1770 = vadd.f32 %v1513, %v1769
        %v1771 = vpop.f32.mrb[0].mxu0
        %v1772 = vadd.f32 %v1515, %v1771
        %1773 = vmatprep.mubr.f32.mxu0 %v459
        %1774 = vmatmul.mubr.f32.gmra.mrb[0].mxu0 %v458
        %v1775 = vpop.f32.mrb[0].mxu0
        %v1776 = vadd.f32 %v1519, %v1775
        %v1777 = vpop.f32.mrb[0].mxu0
        %v1778 = vadd.f32 %v1521, %v1777
        %1779 = vmatprep.mubr.f32.mxu0 %v467
        %1780 = vmatmul.mubr.f32.gmra.mrb[0].mxu0 %v466
        %v1781 = vpop.f32.mrb[0].mxu0
        %v1782 = vadd.f32 %v1525, %v1781
        %v1783 = vpop.f32.mrb[0].mxu0
        %v1784 = vadd.f32 %v1527, %v1783
        %1785 = vmatprep.mubr.f32.mxu0 %v475
        %1786 = vmatmul.mubr.f32.gmra.mrb[0].mxu0 %v474
        %v1787 = vpop.f32.mrb[0].mxu0
        %v1788 = vadd.f32 %v1531, %v1787
        %v1789 = vpop.f32.mrb[0].mxu0
        %v1790 = vadd.f32 %v1533, %v1789
        %1791 = vmatprep.mubr.f32.mxu0 %v483
        %1792 = vmatmul.mubr.f32.gmra.mrb[0].mxu0 %v482
        %v1793 = vpop.f32.mrb[0].mxu0
        %v1794 = vadd.f32 %v1537, %v1793
        %v1795 = vpop.f32.mrb[0].mxu0
        %v1796 = vadd.f32 %v1539, %v1795
        %1797 = vmatprep.mubr.f32.mxu0 %v491
        %1798 = vmatmul.mubr.f32.gmra.mrb[0].mxu0 %v490
        %v1799 = vpop.f32.mrb[0].mxu0
        %v1800 = vadd.f32 %v1543, %v1799
        %v1801 = vpop.f32.mrb[0].mxu0
        %v1802 = vadd.f32 %v1545, %v1801
        %1803 = vmatprep.mubr.f32.mxu0 %v499
        %1804 = vmatmul.mubr.f32.gmra.mrb[0].mxu0 %v498
        %v1805 = vpop.f32.mrb[0].mxu0
        %v1806 = vadd.f32 %v1549, %v1805
        %v1807 = vpop.f32.mrb[0].mxu0
        %v1808 = vadd.f32 %v1551, %v1807
        %1809 = vmatprep.mubr.f32.mxu0 %v507
        %1810 = vmatmul.mubr.f32.gmra.mrb[0].mxu0 %v506
        %v1811 = vpop.f32.mrb[0].mxu0
        %v1812 = vadd.f32 %v1555, %v1811
        %v1813 = vpop.f32.mrb[0].mxu0
        %v1814 = vadd.f32 %v1557, %v1813
        %1815 = vmatprep.mubr.f32.mxu0 %v515
        %1816 = vmatmul.mubr.f32.gmra.mrb[0].mxu0 %v514
        %v1817 = vpop.f32.mrb[0].mxu0
        %v1818 = vadd.f32 %v1561, %v1817
        %v1819 = vpop.f32.mrb[0].mxu0
        %v1820 = vadd.f32 %v1563, %v1819
        %1821 = vmatprep.mubr.f32.mxu0 %v523
        %1822 = vmatmul.mubr.f32.gmra.mrb[0].mxu0 %v522
        %v1823 = vpop.f32.mrb[0].mxu0
        %v1824 = vadd.f32 %v1567, %v1823
        %v1825 = vpop.f32.mrb[0].mxu0
        %v1826 = vadd.f32 %v1569, %v1825
        %1827 = vmatprep.mubr.f32.mxu0 %v531
        %1828 = vmatmul.mubr.f32.gmra.mrb[0].mxu0 %v530
        %v1829 = vpop.f32.mrb[0].mxu0
        %v1830 = vadd.f32 %v1573, %v1829
        %v1831 = vpop.f32.mrb[0].mxu0
        %v1832 = vadd.f32 %v1575, %v1831
        %1833 = vmatprep.mubr.f32.mxu0 %v539
        %1834 = vmatmul.mubr.f32.gmra.mrb[0].mxu0 %v538
        %v1835 = vpop.f32.mrb[0].mxu0
        %v1836 = vadd.f32 %v1579, %v1835
        %v1837 = vpop.f32.mrb[0].mxu0
        %v1838 = vadd.f32 %v1581, %v1837
        %1839 = vmatprep.mubr.f32.mxu0 %v547
        %1840 = vmatmul.mubr.f32.gmra.mrb[0].mxu0 %v546
        %v1841 = vpop.f32.mrb[0].mxu0
        %v1842 = vadd.f32 %v1585, %v1841
        %v1843 = vpop.f32.mrb[0].mxu0
        %v1844 = vadd.f32 %v1587, %v1843
        %1845 = vmatprep.mubr.f32.mxu0 %v555
        %1846 = vmatmul.mubr.f32.gmra.mrb[0].mxu0 %v554
        %v1847 = vpop.f32.mrb[0].mxu0
        %v1848 = vadd.f32 %v1591, %v1847
        %v1849 = vpop.f32.mrb[0].mxu0
        %v1850 = vadd.f32 %v1593, %v1849
        %1851 = vdwg.mxu0
        %v1852 = vtanh.pop %v1662
        %v1853 = vtanh.pop %v1664
        %v1854 = vtanh.pop %v1668
        %v1855 = vtanh.pop %v1670
        %v1856 = vtanh.pop %v1674
        %v1857 = vtanh.pop %v1676
        %v1858 = vtanh.pop %v1680
        %v1859 = vtanh.pop %v1682
        %v1860 = vtanh.pop %v1686
        %v1861 = vtanh.pop %v1688
        %v1862 = vtanh.pop %v1692
        %v1863 = vtanh.pop %v1694
        %v1864 = vtanh.pop %v1698
        %v1865 = vtanh.pop %v1700
        %v1866 = vtanh.pop %v1704
        %v1867 = vtanh.pop %v1706
        %v1868 = vtanh.pop %v1710
        %v1869 = vtanh.pop %v1712
        %v1870 = vtanh.pop %v1716
        %v1871 = vtanh.pop %v1718
        %v1872 = vtanh.pop %v1722
        %v1873 = vtanh.pop %v1724
        %v1874 = vtanh.pop %v1728
        %v1875 = vtanh.pop %v1730
        %v1876 = vtanh.pop %v1734
        %v1877 = vtanh.pop %v1736
        %v1878 = vtanh.pop %v1740
        %v1879 = vtanh.pop %v1742
        %v1880 = vtanh.pop %v1746
        %v1881 = vtanh.pop %v1748
        %v1882 = vtanh.pop %v1752
        %v1883 = vtanh.pop %v1754
        %v1884 = vtanh.pop %v1758
        %v1885 = vtanh.pop %v1760
        %v1886 = vtanh.pop %v1764
        %v1887 = vtanh.pop %v1766
        %v1888 = vtanh.pop %v1770
        %v1889 = vtanh.pop %v1772
        %v1890 = vtanh.pop %v1776
        %v1891 = vtanh.pop %v1778
        %v1892 = vtanh.pop %v1782
        %v1893 = vtanh.pop %v1784
        %v1894 = vtanh.pop %v1788
        %v1895 = vtanh.pop %v1790
        %v1896 = vtanh.pop %v1794
        %v1897 = vtanh.pop %v1796
        %v1898 = vtanh.pop %v1800
        %v1899 = vtanh.pop %v1802
        %v1900 = vtanh.pop %v1806
        %v1901 = vtanh.pop %v1808
        %v1902 = vtanh.pop %v1812
        %v1903 = vtanh.pop %v1814
        %v1904 = vtanh.pop %v1818
        %v1905 = vtanh.pop %v1820
        %v1906 = vtanh.pop %v1824
        %v1907 = vtanh.pop %v1826
        %v1908 = vtanh.pop %v1830
        %v1909 = vtanh.pop %v1832
        %v1910 = vtanh.pop %v1836
        %v1911 = vtanh.pop %v1838
        %v1912 = vtanh.pop %v1842
        %v1913 = vtanh.pop %v1844
        %v1914 = vtanh.pop %v1848
        %v1915 = vtanh.pop %v1850
        %v1916 = vld [vmem:[#allocation8] sm:$0xff]
        %v1917 = vld [vmem:[#allocation8 + $0x8] sm:$0xff]
        %v1918 = vld [vmem:[#allocation8 + $0x10] sm:$0xff]
        %v1919 = vld [vmem:[#allocation8 + $0x18] sm:$0xff]
        %v1920 = vld [vmem:[#allocation8 + $0x20] sm:$0xff]
        %v1921 = vld [vmem:[#allocation8 + $0x28] sm:$0xff]
        %v1922 = vld [vmem:[#allocation8 + $0x30] sm:$0xff]
        %v1923 = vld [vmem:[#allocation8 + $0x38] sm:$0xff]
        %v1924 = vld [vmem:[#allocation8 + $0x40] sm:$0xff]
        %v1925 = vld [vmem:[#allocation8 + $0x48] sm:$0xff]
        %v1926 = vld [vmem:[#allocation8 + $0x50] sm:$0xff]
        %v1927 = vld [vmem:[#allocation8 + $0x58] sm:$0xff]
        %v1928 = vld [vmem:[#allocation8 + $0x60] sm:$0xff]
        %v1929 = vld [vmem:[#allocation8 + $0x68] sm:$0xff]
        %v1930 = vld [vmem:[#allocation8 + $0x70] sm:$0xff]
        %v1931 = vld [vmem:[#allocation8 + $0x78] sm:$0xff]
        %v1932 = vld [vmem:[#allocation8 + $0x80] sm:$0xff]
        %v1933 = vld [vmem:[#allocation8 + $0x88] sm:$0xff]
        %v1934 = vld [vmem:[#allocation8 + $0x90] sm:$0xff]
        %v1935 = vld [vmem:[#allocation8 + $0x98] sm:$0xff]
        %v1936 = vld [vmem:[#allocation8 + $0xa0] sm:$0xff]
        %v1937 = vld [vmem:[#allocation8 + $0xa8] sm:$0xff]
        %v1938 = vld [vmem:[#allocation8 + $0xb0] sm:$0xff]
        %v1939 = vld [vmem:[#allocation8 + $0xb8] sm:$0xff]
        %v1940 = vld [vmem:[#allocation8 + $0xc0] sm:$0xff]
        %v1941 = vld [vmem:[#allocation8 + $0xc8] sm:$0xff]
        %v1942 = vld [vmem:[#allocation8 + $0xd0] sm:$0xff]
        %v1943 = vld [vmem:[#allocation8 + $0xd8] sm:$0xff]
        %v1944 = vld [vmem:[#allocation8 + $0xe0] sm:$0xff]
        %v1945 = vld [vmem:[#allocation8 + $0xe8] sm:$0xff]
        %v1946 = vld [vmem:[#allocation8 + $0xf0] sm:$0xff]
        %v1947 = vld [vmem:[#allocation8 + $0xf8] sm:$0xff]
        %v1948 = vld [vmem:[#allocation10] sm:$0x1]
        %v1950 = vlaneseq
        %v1951 = vshrl.u32 %v1950, 7
        %v1952 = vsub.s32 0, %v1951
        %v1953 = vrot.slane %v1948, %v1952
        %1955 = vmatprep.subr.mxu0 0.0
        %1956 = vmatpush1.msra.mxu0 %v1916
        %1957 = vmatprep.subr.mxu0 0.0
        %1958 = vmatpush1.msra.mxu0 %v1917
        %1959 = vmatprep.subr.mxu0 0.0
        %1960 = vmatpush1.msra.mxu0 %v1918
        %1961 = vmatprep.subr.mxu0 0.0
        %1962 = vmatpush1.msra.mxu0 %v1919
        %1963 = vmatprep.subr.mxu0 0.0
        %1964 = vmatpush1.msra.mxu0 %v1920
        %1965 = vmatprep.subr.mxu0 0.0
        %1966 = vmatpush1.msra.mxu0 %v1921
        %1967 = vmatprep.subr.mxu0 0.0
        %1968 = vmatpush1.msra.mxu0 %v1922
        %1969 = vmatprep.subr.mxu0 0.0
        %1970 = vmatpush1.msra.mxu0 %v1923
        %1971 = vmatprep.subr.mxu0 0.0
        %1972 = vmatpush1.msra.mxu0 %v1924
        %1973 = vmatprep.subr.mxu0 0.0
        %1974 = vmatpush1.msra.mxu0 %v1925
        %1975 = vmatprep.subr.mxu0 0.0
        %1976 = vmatpush1.msra.mxu0 %v1926
        %1977 = vmatprep.subr.mxu0 0.0
        %1978 = vmatpush1.msra.mxu0 %v1927
        %1979 = vmatprep.subr.mxu0 0.0
        %1980 = vmatpush1.msra.mxu0 %v1928
        %1981 = vmatprep.subr.mxu0 0.0
        %1982 = vmatpush1.msra.mxu0 %v1929
        %1983 = vmatprep.subr.mxu0 0.0
        %1984 = vmatpush1.msra.mxu0 %v1930
        %1985 = vmatprep.subr.mxu0 0.0
        %1986 = vmatpush1.msra.mxu0 %v1931
        %1987 = vmatprep.subr.mxu0 0.0
        %1988 = vmatpush1.msra.mxu0 %v1932
        %1989 = vmatprep.subr.mxu0 0.0
        %1990 = vmatpush1.msra.mxu0 %v1933
        %1991 = vmatprep.subr.mxu0 0.0
        %1992 = vmatpush1.msra.mxu0 %v1934
        %1993 = vmatprep.subr.mxu0 0.0
        %1994 = vmatpush1.msra.mxu0 %v1935
        %1995 = vmatprep.subr.mxu0 0.0
        %1996 = vmatpush1.msra.mxu0 %v1936
        %1997 = vmatprep.subr.mxu0 0.0
        %1998 = vmatpush1.msra.mxu0 %v1937
        %1999 = vmatprep.subr.mxu0 0.0
        %2000 = vmatpush1.msra.mxu0 %v1938
        %2001 = vmatprep.subr.mxu0 0.0
        %2002 = vmatpush1.msra.mxu0 %v1939
        %2003 = vmatprep.subr.mxu0 0.0
        %2004 = vmatpush1.msra.mxu0 %v1940
        %2005 = vmatprep.subr.mxu0 0.0
        %2006 = vmatpush1.msra.mxu0 %v1941
        %2007 = vmatprep.subr.mxu0 0.0
        %2008 = vmatpush1.msra.mxu0 %v1942
        %2009 = vmatprep.subr.mxu0 0.0
        %2010 = vmatpush1.msra.mxu0 %v1943
        %2011 = vmatprep.subr.mxu0 0.0
        %2012 = vmatpush1.msra.mxu0 %v1944
        %2013 = vmatprep.subr.mxu0 0.0
        %2014 = vmatpush1.msra.mxu0 %v1945
        %2015 = vmatprep.subr.mxu0 0.0
        %2016 = vmatpush1.msra.mxu0 %v1946
        %2017 = vmatprep.subr.mxu0 0.0
        %2018 = vmatpush1.msra.mxu0 %v1947
        %2019 = vmatprep.mubr.f32.mxu0 %v1853
        %2020 = vmatmul.mubr.f32.gmra.mrb[0].mxu0 %v1852
        %v2021 = vpop.f32.mrb[0].mxu0
        %v2022 = vadd.f32 %v1953, %v2021
        %v2023 = vpop.f32.mrb[0].mxu0
        %2024 = vmatprep.mubr.f32.mxu0 %v1855
        %2025 = vmatmul.mubr.f32.gmra.mrb[0].mxu0 %v1854
        %v2026 = vpop.f32.mrb[0].mxu0
        %v2027 = vadd.f32 %v1953, %v2026
        %v2028 = vpop.f32.mrb[0].mxu0
        %2029 = vmatprep.mubr.f32.mxu0 %v1857
        %2030 = vmatmul.mubr.f32.gmra.mrb[0].mxu0 %v1856
        %v2031 = vpop.f32.mrb[0].mxu0
        %v2032 = vadd.f32 %v1953, %v2031
        %v2033 = vpop.f32.mrb[0].mxu0
        %2034 = vmatprep.mubr.f32.mxu0 %v1859
        %2035 = vmatmul.mubr.f32.gmra.mrb[0].mxu0 %v1858
        %v2036 = vpop.f32.mrb[0].mxu0
        %v2037 = vadd.f32 %v1953, %v2036
        %v2038 = vpop.f32.mrb[0].mxu0
        %2039 = vmatprep.mubr.f32.mxu0 %v1861
        %2040 = vmatmul.mubr.f32.gmra.mrb[0].mxu0 %v1860
        %v2041 = vpop.f32.mrb[0].mxu0
        %v2042 = vadd.f32 %v1953, %v2041
        %v2043 = vpop.f32.mrb[0].mxu0
        %2044 = vmatprep.mubr.f32.mxu0 %v1863
        %2045 = vmatmul.mubr.f32.gmra.mrb[0].mxu0 %v1862
        %v2046 = vpop.f32.mrb[0].mxu0
        %v2047 = vadd.f32 %v1953, %v2046
        %v2048 = vpop.f32.mrb[0].mxu0
        %2049 = vmatprep.mubr.f32.mxu0 %v1865
        %2050 = vmatmul.mubr.f32.gmra.mrb[0].mxu0 %v1864
        %v2051 = vpop.f32.mrb[0].mxu0
        %v2052 = vadd.f32 %v1953, %v2051
        %v2053 = vpop.f32.mrb[0].mxu0
        %2054 = vmatprep.mubr.f32.mxu0 %v1867
        %2055 = vmatmul.mubr.f32.gmra.mrb[0].mxu0 %v1866
        %v2056 = vpop.f32.mrb[0].mxu0
        %v2057 = vadd.f32 %v1953, %v2056
        %v2058 = vpop.f32.mrb[0].mxu0
        %2059 = vmatprep.mubr.f32.mxu0 %v1869
        %2060 = vmatmul.mubr.f32.gmra.mrb[0].mxu0 %v1868
        %v2061 = vpop.f32.mrb[0].mxu0
        %v2062 = vadd.f32 %v1953, %v2061
        %v2063 = vpop.f32.mrb[0].mxu0
        %2064 = vmatprep.mubr.f32.mxu0 %v1871
        %2065 = vmatmul.mubr.f32.gmra.mrb[0].mxu0 %v1870
        %v2066 = vpop.f32.mrb[0].mxu0
        %v2067 = vadd.f32 %v1953, %v2066
        %v2068 = vpop.f32.mrb[0].mxu0
        %2069 = vmatprep.mubr.f32.mxu0 %v1873
        %2070 = vmatmul.mubr.f32.gmra.mrb[0].mxu0 %v1872
        %v2071 = vpop.f32.mrb[0].mxu0
        %v2072 = vadd.f32 %v1953, %v2071
        %v2073 = vpop.f32.mrb[0].mxu0
        %2074 = vmatprep.mubr.f32.mxu0 %v1875
        %2075 = vmatmul.mubr.f32.gmra.mrb[0].mxu0 %v1874
        %v2076 = vpop.f32.mrb[0].mxu0
        %v2077 = vadd.f32 %v1953, %v2076
        %v2078 = vpop.f32.mrb[0].mxu0
        %2079 = vmatprep.mubr.f32.mxu0 %v1877
        %2080 = vmatmul.mubr.f32.gmra.mrb[0].mxu0 %v1876
        %v2081 = vpop.f32.mrb[0].mxu0
        %v2082 = vadd.f32 %v1953, %v2081
        %v2083 = vpop.f32.mrb[0].mxu0
        %2084 = vmatprep.mubr.f32.mxu0 %v1879
        %2085 = vmatmul.mubr.f32.gmra.mrb[0].mxu0 %v1878
        %v2086 = vpop.f32.mrb[0].mxu0
        %v2087 = vadd.f32 %v1953, %v2086
        %v2088 = vpop.f32.mrb[0].mxu0
        %2089 = vmatprep.mubr.f32.mxu0 %v1881
        %2090 = vmatmul.mubr.f32.gmra.mrb[0].mxu0 %v1880
        %v2091 = vpop.f32.mrb[0].mxu0
        %v2092 = vadd.f32 %v1953, %v2091
        %v2093 = vpop.f32.mrb[0].mxu0
        %2094 = vmatprep.mubr.f32.mxu0 %v1883
        %2095 = vmatmul.mubr.f32.gmra.mrb[0].mxu0 %v1882
        %v2096 = vpop.f32.mrb[0].mxu0
        %v2097 = vadd.f32 %v1953, %v2096
        %v2098 = vpop.f32.mrb[0].mxu0
        %2099 = vmatprep.mubr.f32.mxu0 %v1885
        %2100 = vmatmul.mubr.f32.gmra.mrb[0].mxu0 %v1884
        %v2101 = vpop.f32.mrb[0].mxu0
        %v2102 = vadd.f32 %v1953, %v2101
        %v2103 = vpop.f32.mrb[0].mxu0
        %2104 = vmatprep.mubr.f32.mxu0 %v1887
        %2105 = vmatmul.mubr.f32.gmra.mrb[0].mxu0 %v1886
        %v2106 = vpop.f32.mrb[0].mxu0
        %v2107 = vadd.f32 %v1953, %v2106
        %v2108 = vpop.f32.mrb[0].mxu0
        %2109 = vmatprep.mubr.f32.mxu0 %v1889
        %2110 = vmatmul.mubr.f32.gmra.mrb[0].mxu0 %v1888
        %v2111 = vpop.f32.mrb[0].mxu0
        %v2112 = vadd.f32 %v1953, %v2111
        %v2113 = vpop.f32.mrb[0].mxu0
        %2114 = vmatprep.mubr.f32.mxu0 %v1891
        %2115 = vmatmul.mubr.f32.gmra.mrb[0].mxu0 %v1890
        %v2116 = vpop.f32.mrb[0].mxu0
        %v2117 = vadd.f32 %v1953, %v2116
        %v2118 = vpop.f32.mrb[0].mxu0
        %2119 = vmatprep.mubr.f32.mxu0 %v1893
        %2120 = vmatmul.mubr.f32.gmra.mrb[0].mxu0 %v1892
        %v2121 = vpop.f32.mrb[0].mxu0
        %v2122 = vadd.f32 %v1953, %v2121
        %v2123 = vpop.f32.mrb[0].mxu0
        %2124 = vmatprep.mubr.f32.mxu0 %v1895
        %2125 = vmatmul.mubr.f32.gmra.mrb[0].mxu0 %v1894
        %v2126 = vpop.f32.mrb[0].mxu0
        %v2127 = vadd.f32 %v1953, %v2126
        %v2128 = vpop.f32.mrb[0].mxu0
        %2129 = vmatprep.mubr.f32.mxu0 %v1897
        %2130 = vmatmul.mubr.f32.gmra.mrb[0].mxu0 %v1896
        %v2131 = vpop.f32.mrb[0].mxu0
        %v2132 = vadd.f32 %v1953, %v2131
        %v2133 = vpop.f32.mrb[0].mxu0
        %2134 = vmatprep.mubr.f32.mxu0 %v1899
        %2135 = vmatmul.mubr.f32.gmra.mrb[0].mxu0 %v1898
        %v2136 = vpop.f32.mrb[0].mxu0
        %v2137 = vadd.f32 %v1953, %v2136
        %v2138 = vpop.f32.mrb[0].mxu0
        %2139 = vmatprep.mubr.f32.mxu0 %v1901
        %2140 = vmatmul.mubr.f32.gmra.mrb[0].mxu0 %v1900
        %v2141 = vpop.f32.mrb[0].mxu0
        %v2142 = vadd.f32 %v1953, %v2141
        %v2143 = vpop.f32.mrb[0].mxu0
        %2144 = vmatprep.mubr.f32.mxu0 %v1903
        %2145 = vmatmul.mubr.f32.gmra.mrb[0].mxu0 %v1902
        %v2146 = vpop.f32.mrb[0].mxu0
        %v2147 = vadd.f32 %v1953, %v2146
        %v2148 = vpop.f32.mrb[0].mxu0
        %2149 = vmatprep.mubr.f32.mxu0 %v1905
        %2150 = vmatmul.mubr.f32.gmra.mrb[0].mxu0 %v1904
        %v2151 = vpop.f32.mrb[0].mxu0
        %v2152 = vadd.f32 %v1953, %v2151
        %v2153 = vpop.f32.mrb[0].mxu0
        %2154 = vmatprep.mubr.f32.mxu0 %v1907
        %2155 = vmatmul.mubr.f32.gmra.mrb[0].mxu0 %v1906
        %v2156 = vpop.f32.mrb[0].mxu0
        %v2157 = vadd.f32 %v1953, %v2156
        %v2158 = vpop.f32.mrb[0].mxu0
        %2159 = vmatprep.mubr.f32.mxu0 %v1909
        %2160 = vmatmul.mubr.f32.gmra.mrb[0].mxu0 %v1908
        %v2161 = vpop.f32.mrb[0].mxu0
        %v2162 = vadd.f32 %v1953, %v2161
        %v2163 = vpop.f32.mrb[0].mxu0
        %2164 = vmatprep.mubr.f32.mxu0 %v1911
        %2165 = vmatmul.mubr.f32.gmra.mrb[0].mxu0 %v1910
        %v2166 = vpop.f32.mrb[0].mxu0
        %v2167 = vadd.f32 %v1953, %v2166
        %v2168 = vpop.f32.mrb[0].mxu0
        %2169 = vmatprep.mubr.f32.mxu0 %v1913
        %2170 = vmatmul.mubr.f32.gmra.mrb[0].mxu0 %v1912
        %v2171 = vpop.f32.mrb[0].mxu0
        %v2172 = vadd.f32 %v1953, %v2171
        %v2173 = vpop.f32.mrb[0].mxu0
        %2174 = vmatprep.mubr.f32.mxu0 %v1915
        %2175 = vmatmul.mubr.f32.gmra.mrb[0].mxu0 %v1914
        %v2176 = vpop.f32.mrb[0].mxu0
        %v2177 = vadd.f32 %v1953, %v2176
        %v2178 = vpop.f32.mrb[0].mxu0
        %2179 = vdwg.mxu0
        %2180 = vst [vmem:[%s297] sm:$0xff] %v2022
        %2181 = vst [vmem:[%s297 + $0x8] sm:$0xff] %v2027
        %2182 = vst [vmem:[%s297 + $0x10] sm:$0xff] %v2032
        %2183 = vst [vmem:[%s297 + $0x18] sm:$0xff] %v2037
        %2184 = vst [vmem:[%s297 + $0x20] sm:$0xff] %v2042
        %2185 = vst [vmem:[%s297 + $0x28] sm:$0xff] %v2047
        %2186 = vst [vmem:[%s297 + $0x30] sm:$0xff] %v2052
        %2187 = vst [vmem:[%s297 + $0x38] sm:$0xff] %v2057
        %2188 = vst [vmem:[%s297 + $0x40] sm:$0xff] %v2062
        %2189 = vst [vmem:[%s297 + $0x48] sm:$0xff] %v2067
        %2190 = vst [vmem:[%s297 + $0x50] sm:$0xff] %v2072
        %2191 = vst [vmem:[%s297 + $0x58] sm:$0xff] %v2077
        %2192 = vst [vmem:[%s297 + $0x60] sm:$0xff] %v2082
        %2193 = vst [vmem:[%s297 + $0x68] sm:$0xff] %v2087
        %2194 = vst [vmem:[%s297 + $0x70] sm:$0xff] %v2092
        %2195 = vst [vmem:[%s297 + $0x78] sm:$0xff] %v2097
        %2196 = vst [vmem:[%s297 + $0x80] sm:$0xff] %v2102
        %2197 = vst [vmem:[%s297 + $0x88] sm:$0xff] %v2107
        %2198 = vst [vmem:[%s297 + $0x90] sm:$0xff] %v2112
        %2199 = vst [vmem:[%s297 + $0x98] sm:$0xff] %v2117
        %2200 = vst [vmem:[%s297 + $0xa0] sm:$0xff] %v2122
        %2201 = vst [vmem:[%s297 + $0xa8] sm:$0xff] %v2127
        %2202 = vst [vmem:[%s297 + $0xb0] sm:$0xff] %v2132
        %2203 = vst [vmem:[%s297 + $0xb8] sm:$0xff] %v2137
        %2204 = vst [vmem:[%s297 + $0xc0] sm:$0xff] %v2142
        %2205 = vst [vmem:[%s297 + $0xc8] sm:$0xff] %v2147
        %2206 = vst [vmem:[%s297 + $0xd0] sm:$0xff] %v2152
        %2207 = vst [vmem:[%s297 + $0xd8] sm:$0xff] %v2157
        %2208 = vst [vmem:[%s297 + $0xe0] sm:$0xff] %v2162
        %2209 = vst [vmem:[%s297 + $0xe8] sm:$0xff] %v2167
        %2210 = vst [vmem:[%s297 + $0xf0] sm:$0xff] %v2172
        %2211 = vst [vmem:[%s297 + $0xf8] sm:$0xff] %v2177
        %s2212 = sand.u32 %s142, 1
        %s2213 = scalar_lea.sflag [#allocation4], %s2212
        %s2214 = sand.u32 %s142, 1
        %s2215 = smul.addr %s2214, 256
        %s2216 = scalar_lea.vmem [#allocation11], %s2215
        // Predicated region
        $region61: #{tpu_custom_call.1} parent=39 // pred_check
          %p2217 = pneg %p152
        $region62: #{tpu_custom_call.1} parent=39 // pred_check_branch
          %2219 = sbr.rel (%p2217) target = $region64
        $region63: #{tpu_custom_call.1} parent=39 // pred_region
          %s2220 = smul.u32 32, %s24
          %s2222 = ssub.s32 4096, 4096
          %2223 = vsyncadd %s2213, %s2222
          %s2224 = smul.addr %s2220, 128
          %s2225 = scalar_lea.hbm %s5, %s2224
          %s2226 = sshll.u32 %s2216, 4
          %s2227 = int_to_ptr.vmem [resolvable:$true] %s2226
          %2232 = dma.vmem_to_hbm [thread:$0]  %s2227, 4096, %s2225, %s2213, 128, 128, 8
        $region64: #{tpu_custom_call.1} parent=39 // pred_fallthru
          _
      $region40: #{tpu_custom_call.1} parent=5 // pred_fallthru
        _
      %p2233 = scmp.le.s32.totalorder 2, %s19
      // Predicated region
      $region65: #{tpu_custom_call.1} parent=5 // pred_check
        %p2234 = pneg %p2233
      $region66: #{tpu_custom_call.1} parent=5 // pred_check_branch
        %2236 = sbr.rel (%p2234) target = $region68
      $region67: #{tpu_custom_call.1} parent=5 // pred_region
        %s2237 = ssub.s32 %s19, 2
        // Predicated region
        $region69: #{tpu_custom_call.1} parent=67 // pred_check
          %p2238 = pneg %p158
        $region70: #{tpu_custom_call.1} parent=67 // pred_check_branch
          %2240 = sbr.rel (%p2238) target = $region72
        $region71: #{tpu_custom_call.1} parent=67 // pred_region
          %s2241 = sand.u32 %s143, 1
          %s2242 = scalar_lea.sflag [#allocation4], %s2241
          %s2243 = sand.u32 %s143, 1
          %s2244 = smul.addr %s2243, 256
          %s2245 = scalar_lea.vmem [#allocation11], %s2244
          %2246 = dma.done %s2242, 4096
        $region72: #{tpu_custom_call.1} parent=67 // pred_fallthru
          _
      $region68: #{tpu_custom_call.1} parent=5 // pred_fallthru
        _
    $region6: #{tpu_custom_call.1} parent=1 // loop_footer
      %s23 = sadd.s32 1, %s19
    $region7: #{tpu_custom_call.1} parent=1 // loop_footer_branch
      %18 = sbr.rel target = $region3
    $region8: #{tpu_custom_call.1} parent=1 // loop_exit
      _
    %2247 = vsyncpa [#allocation3], 1
    %s2248 = scalar_lea.sflag [#allocation3], 1
    %2249 = vsyncpa %s2248, 1
    %2250 = vsyncpa [#allocation6], 1
    %2251 = vsyncpa [#allocation9], 1
    %2252 = vsyncpa [#allocation4], 1
    %s2253 = scalar_lea.sflag [#allocation4], 1
    %2254 = vsyncpa %s2253, 1

</llo_original>
